<compile_context>
chip_gen: v6e
topology: v6e:2x2x1
jax: 0.10.0
libtpu: 0.0.40
codegen_flags: <defaults>
</compile_context>

<pallas_src>
import math
import functools

import jax
import jax.numpy as jnp
from jax.experimental import pallas as pl
from jax.experimental.pallas import tpu as pltpu


def _attn_kernel(*refs, n_head, hidden_dim, flag, precise, k_len, k_tile, mask_k):
    if flag:
        (k_ref, q_ref, wk_ref, pw_ref, pb_ref, o_ref,
         qx_ref, m_ref, l_ref, acc_ref) = refs
        wq_ref = None
    else:
        (k_ref, q_ref, wk_ref, wq_ref, pw_ref, pb_ref, o_ref,
         qx_ref, m_ref, l_ref, acc_ref) = refs

    H = hidden_dim
    cd = qx_ref.dtype                       # MXU operand dtype (f32 precise, bf16 fast)
    ki = pl.program_id(2)
    nk = pl.num_programs(2)
    inv_scale = 1.0 / math.sqrt(H)

    # ---- init (once per (batch, q-tile)): qx projection + running-softmax state ----
    @pl.when(ki == 0)
    def _init():
        if flag:
            # q already lives in hidden space and is shared across heads.
            qx_ref[...] = (q_ref[...].astype(jnp.float32) * inv_scale).astype(cd)
        else:
            qx = jax.nn.sigmoid(jnp.dot(q_ref[...], wq_ref[...],
                                        preferred_element_type=jnp.float32))
            # fold the 1/sqrt(H) scale into qx (cheaper than scaling the score tensor)
            qx_ref[...] = (qx * inv_scale).astype(cd)
        m_ref[...] = jnp.full(m_ref.shape, -1e30, m_ref.dtype)
        l_ref[...] = jnp.zeros(l_ref.shape, l_ref.dtype)
        acc_ref[...] = jnp.zeros(acc_ref.shape, acc_ref.dtype)

    # ---- kx for ALL heads from this k chunk in one stacked matmul ----
    kx = jax.nn.sigmoid(jnp.dot(k_ref[...], wk_ref[...],
                                preferred_element_type=jnp.float32))   # (k_tile, nH*H) f32
    kx_c = kx.astype(cd)                    # hoisted cast, reused by QK^T and PV

    if mask_k:
        key_pos = ki * k_tile + jax.lax.broadcasted_iota(jnp.int32, (1, k_tile), 1)
        kmask = key_pos < k_len             # (1, k_tile); padded key rows masked out

    qx_all = qx_ref[...]                    # (q_tile, nH*H) or (q_tile, H), already scaled

    # ---- per-head online-softmax update (static unroll; one head live at a time) ----
    for h in range(n_head):
        qh = qx_all if flag else qx_all[:, h * H:(h + 1) * H]          # (q_tile, H)
        kh = kx_c[:, h * H:(h + 1) * H]                                # (k_tile, H)
        s = jax.lax.dot_general(qh, kh, (((1,), (1,)), ((), ())),
                                preferred_element_type=jnp.float32)    # (q_tile, k_tile)
        if mask_k:
            s = jnp.where(kmask, s, -1e30)
        m_prev = m_ref[h]                                              # (q_tile, 1)
        m_new = jnp.maximum(m_prev, jnp.max(s, axis=-1, keepdims=True))
        alpha = jnp.exp(m_prev - m_new)
        p = jnp.exp(s - m_new)
        l_ref[h] = alpha * l_ref[h] + jnp.sum(p, axis=-1, keepdims=True)
        acc_ref[h] = alpha * acc_ref[h] + jnp.dot(
            p.astype(cd), kh, preferred_element_type=jnp.float32)      # (q_tile, H)
        m_ref[h] = m_new

    # ---- finalize: normalize + incremental projection (no concat over heads) ----
    @pl.when(ki == nk - 1)
    def _finalize():
        pw_all = pw_ref[...]                                           # (nH*H, out_pad)
        acc_out = None
        for h in range(n_head):
            if precise:
                o_h = acc_ref[h] / l_ref[h]
            else:
                o_h = acc_ref[h] * pl.reciprocal(l_ref[h], approx=True)  # EUP slot
            contrib = jnp.dot(o_h.astype(cd), pw_all[h * H:(h + 1) * H, :],
                              preferred_element_type=jnp.float32)
            acc_out = contrib if acc_out is None else acc_out + contrib
        # single, lane-dense (out_pad % 128 == 0) store of the output tile
        o_ref[...] = (acc_out + pb_ref[...]).astype(o_ref.dtype)

    # TODO(synk): 'mlp' and 'bi_linear' score functions not implemented (only the default
    # 'scaled_dot_product'); dropout(p=0) is a no-op.


def _round_up(x, m):
    return ((x + m - 1) // m) * m


def self_dim_multihead_attention(k, q, w_kx, w_qx, proj_w, proj_b, *,
                                 flag=False, precise=False,
                                 q_tile=None, k_tile=None):
    """Pallas implementation of Self_dimMultiHead_Attention1.forward (scaled_dot_product)."""
    if q.ndim == 2:
        q = q[:, None, :]
    if k.ndim == 2:
        k = k[:, None, :]

    n_head, embed_dim, hidden_dim = w_kx.shape
    mb, k_len, _ = k.shape
    q_len = q.shape[1]
    nhh = n_head * hidden_dim
    out_dim = proj_w.shape[1]

    if flag:
        assert q.shape[-1] == hidden_dim, "flag=True expects q already in hidden space"
    else:
        assert q.shape[-1] == embed_dim

    # Tile choice: multiples of 8 rows, capped so the per-step working set stays small
    # even under v7x's 64 MiB VMEM.
    if q_tile is None:
        q_tile = min(512, _round_up(q_len, 8))
    if k_tile is None:
        k_tile = min(512, _round_up(k_len, 8))
    q_pad = _round_up(q_len, q_tile)
    k_pad = _round_up(k_len, k_tile)

    cd = jnp.float32 if precise else jnp.bfloat16    # MXU operand dtype

    # Pad sequence dims (avoids (8,128)-crossing reshapes in-kernel); ship operands in cd
    # so the fast path halves HBM->VMEM DMA bytes.
    kP = jnp.pad(k, ((0, 0), (0, k_pad - k_len), (0, 0))).astype(cd)
    qP = jnp.pad(q, ((0, 0), (0, q_pad - q_len), (0, 0))).astype(cd)

    # Stack per-head weights so every head's kx/qx comes from one matmul.
    wk_all = jnp.transpose(w_kx, (1, 0, 2)).reshape(embed_dim, nhh).astype(cd)

    # Lane-dense output: pad out_dim to a multiple of 128, slice after the kernel.
    out_pad = _round_up(out_dim, 128)
    pwP = jnp.pad(proj_w, ((0, 0), (0, out_pad - out_dim))).astype(cd)
    pbP = jnp.pad(proj_b, (0, out_pad - out_dim)).reshape(1, out_pad).astype(jnp.float32)

    grid = (mb, q_pad // q_tile, k_pad // k_tile)
    dq = hidden_dim if flag else embed_dim

    # Streamed per-step tiles (double-buffered by the pipeline):
    in_specs = [
        pl.BlockSpec((None, k_tile, embed_dim), lambda b, qi, ki: (b, ki, 0)),
        pl.BlockSpec((None, q_tile, dq), lambda b, qi, ki: (b, qi, 0)),
        # VMEM-resident operands (constant block index -> fetched once):
        pl.BlockSpec((embed_dim, nhh), lambda b, qi, ki: (0, 0)),
    ]
    operands = [kP, qP, wk_all]
    if not flag:
        wq_all = jnp.transpose(w_qx, (1, 0, 2)).reshape(embed_dim, nhh).astype(cd)
        in_specs.append(pl.BlockSpec((embed_dim, nhh), lambda b, qi, ki: (0, 0)))
        operands.append(wq_all)
    in_specs += [
        pl.BlockSpec((nhh, out_pad), lambda b, qi, ki: (0, 0)),
        pl.BlockSpec((1, out_pad), lambda b, qi, ki: (0, 0)),
    ]
    operands += [pwP, pbP]

    nqh = hidden_dim if flag else nhh
    scratch_shapes = [
        pltpu.VMEM((q_tile, nqh), cd),                         # qx (pre-scaled), reused across k chunks
        pltpu.VMEM((n_head, q_tile, 1), jnp.float32),          # running max
        pltpu.VMEM((n_head, q_tile, 1), jnp.float32),          # running denom
        pltpu.VMEM((n_head, q_tile, hidden_dim), jnp.float32),  # running numerator
    ]

    kernel = functools.partial(
        _attn_kernel, n_head=n_head, hidden_dim=hidden_dim, flag=flag,
        precise=precise, k_len=k_len, k_tile=k_tile, mask_k=(k_pad != k_len))

    outP = pl.pallas_call(
        kernel,
        out_shape=jax.ShapeDtypeStruct((mb, q_pad, out_pad), jnp.float32),
        grid_spec=pltpu.PrefetchScalarGridSpec(
            num_scalar_prefetch=0,
            grid=grid,
            in_specs=in_specs,
            out_specs=pl.BlockSpec((None, q_tile, out_pad), lambda b, qi, ki: (b, qi, 0)),
            scratch_shapes=scratch_shapes,
        ),
        compiler_params=pltpu.CompilerParams(
            dimension_semantics=("parallel", "parallel", "arbitrary"),
            vmem_limit_bytes=48 * 1024 * 1024,   # explicit (v5e default scoped is only 16 MiB)
        ),
    )(*operands)

    return outP[:, :q_len, :out_dim]


def _reference(k, q, w_kx, w_qx, proj_w, proj_b, *, flag=False):
    """Pure-JAX reference mirroring the PyTorch forward."""
    if q.ndim == 2:
        q = q[:, None, :]
    if k.ndim == 2:
        k = k[:, None, :]
    n_head, _, hidden_dim = w_kx.shape
    outs = []
    for i in range(n_head):
        kx = jax.nn.sigmoid(jnp.einsum('ble,eh->blh', k, w_kx[i]))
        if flag:
            qx = q
        else:
            qx = jax.nn.sigmoid(jnp.einsum('ble,eh->blh', q, w_qx[i]))
        score = jnp.einsum('bqh,bkh->bqk', qx, kx) / math.sqrt(hidden_dim)
        score = jax.nn.softmax(score, axis=-1)
        outs.append(jnp.einsum('bqk,bkh->bqh', score, kx))
    out = jnp.concatenate(outs, axis=-1)
    return out @ proj_w + proj_b


def _init_params(key, embed_dim, n_head):
    """Deterministic synthetic params mimicking reset_parameters (uniform + row renorm)."""
    hidden_dim = embed_dim // n_head
    out_dim = embed_dim
    stdv = 1.0 / math.sqrt(hidden_dim)
    k1, k2, k3, k4 = jax.random.split(key, 4)

    def _renorm_rows(w):
        # torch renorm_(2, 1, 1e-5).mul_(1e5)  ==> unit L2 norm per embed-dim row
        return w / jnp.linalg.norm(w, axis=-1, keepdims=True)

    w_kx = _renorm_rows(jax.random.uniform(
        k1, (n_head, embed_dim, hidden_dim), jnp.float32, -stdv, stdv))
    w_qx = _renorm_rows(jax.random.uniform(
        k2, (n_head, embed_dim, hidden_dim), jnp.float32, -stdv, stdv))

    b = 1.0 / math.sqrt(embed_dim)
    proj_w = jax.random.uniform(k3, (n_head * hidden_dim, out_dim), jnp.float32, -b, b)
    proj_b = jax.random.uniform(k4, (out_dim,), jnp.float32, -b, b)
    return w_kx, w_qx, proj_w, proj_b


if __name__ == "__main__":
    # small shapes consistent with the module's forward
    mb, k_len, q_len = 2, 8, 8
    embed_dim, n_head = 32, 2            # hidden_dim = 16, out_dim = 32
    hidden_dim = embed_dim // n_head

    key = jax.random.PRNGKey(0)
    pkey, kk, kq, kqh, kk2, kq2 = jax.random.split(key, 6)
    w_kx, w_qx, proj_w, proj_b = _init_params(pkey, embed_dim, n_head)

    k = jax.random.normal(kk, (mb, k_len, embed_dim), jnp.float32)
    q = jax.random.normal(kq, (mb, q_len, embed_dim), jnp.float32)

    ref = _reference(k, q, w_kx, w_qx, proj_w, proj_b, flag=False)

    # precise path (f32 MXU operands, exact softmax divide)
    out = jax.block_until_ready(
        self_dim_multihead_attention(k, q, w_kx, w_qx, proj_w, proj_b,
                                     flag=False, precise=True))
    assert out.shape == (mb, q_len, embed_dim)
    assert jnp.allclose(out, ref, rtol=3e-4, atol=3e-4)

    # fast path (bf16 operands shipped from the wrapper, f32 accumulate, approx reciprocal)
    out_fast = jax.block_until_ready(
        self_dim_multihead_attention(k, q, w_kx, w_qx, proj_w, proj_b,
                                     flag=False, precise=False))
    assert jnp.allclose(out_fast, ref, rtol=3e-2, atol=3e-2)

    # flag=True branch: q already in hidden space; w_qx is neither used nor DMA'd
    q_hidden = jax.random.uniform(kqh, (mb, q_len, hidden_dim), jnp.float32)
    out_flag = jax.block_until_ready(
        self_dim_multihead_attention(k, q_hidden, w_kx, w_qx, proj_w, proj_b,
                                     flag=True, precise=True))
    ref_flag = _reference(k, q_hidden, w_kx, w_qx, proj_w, proj_b, flag=True)
    assert jnp.allclose(out_flag, ref_flag, rtol=3e-4, atol=3e-4)

    # ragged lengths: exercises seq padding, key masking, and >1 k-chunk (online softmax)
    k2 = jax.random.normal(kk2, (mb, 11, embed_dim), jnp.float32)
    q2 = jax.random.normal(kq2, (mb, 5, embed_dim), jnp.float32)
    out_r = jax.block_until_ready(
        self_dim_multihead_attention(k2, q2, w_kx, w_qx, proj_w, proj_b,
                                     flag=False, precise=True, k_tile=8))
    ref_r = _reference(k2, q2, w_kx, w_qx, proj_w, proj_b, flag=False)
    assert jnp.allclose(out_r, ref_r, rtol=3e-4, atol=3e-4)

    print("KERNEL_OK")
</pallas_src>

<mosaic_0001>
module attributes {stable_mosaic.version = 11 : i64} {
  func.func @_attn_kernel(%arg0: i32, %arg1: i32, %arg2: i32, %arg3: memref<1x8x32xf32, #tpu.memory_space<vmem>>, %arg4: memref<1x8x32xf32, #tpu.memory_space<vmem>>, %arg5: memref<32x32xf32, #tpu.memory_space<vmem>>, %arg6: memref<32x32xf32, #tpu.memory_space<vmem>>, %arg7: memref<32x128xf32, #tpu.memory_space<vmem>>, %arg8: memref<1x128xf32, #tpu.memory_space<vmem>>, %arg9: memref<1x8x128xf32, #tpu.memory_space<vmem>>, %arg10: memref<8x32xf32, #tpu.memory_space<vmem>>, %arg11: memref<2x8x1xf32, #tpu.memory_space<vmem>>, %arg12: memref<2x8x1xf32, #tpu.memory_space<vmem>>, %arg13: memref<2x8x16xf32, #tpu.memory_space<vmem>>) attributes {dimension_semantics = [#tpu.dimension_semantics<parallel>, #tpu.dimension_semantics<parallel>, #tpu.dimension_semantics<arbitrary>], iteration_bounds = array<i64: 2, 1, 1>, scalar_prefetch = 0 : i64, scratch_operands = 4 : i64, tpu.core_type = #tpu.core_type<tc>, window_params = [{transform_indices = @transform_0, window_bounds = array<i64: 1, 8, 32>}, {transform_indices = @transform_1, window_bounds = array<i64: 1, 8, 32>}, {pipeline_mode = #tpu.pipeline_mode<synchronous>, transform_indices = @transform_2, window_bounds = array<i64: 32, 32>}, {pipeline_mode = #tpu.pipeline_mode<synchronous>, transform_indices = @transform_3, window_bounds = array<i64: 32, 32>}, {pipeline_mode = #tpu.pipeline_mode<synchronous>, transform_indices = @transform_4, window_bounds = array<i64: 32, 128>}, {pipeline_mode = #tpu.pipeline_mode<synchronous>, transform_indices = @transform_5, window_bounds = array<i64: 1, 128>}, {transform_indices = @transform_6, window_bounds = array<i64: 1, 8, 128>}]} {
    %c0_i32 = arith.constant 0 : i32
    %0 = arith.cmpi eq, %arg2, %c0_i32 : i32
    %1 = arith.extui %0 : i1 to i32
    %c0_i32_0 = arith.constant 0 : i32
    %2 = arith.cmpi ne, %1, %c0_i32_0 : i32
    scf.if %2 {
      %c0_53 = arith.constant 0 : index
      %c0_54 = arith.constant 0 : index
      %c0_55 = arith.constant 0 : index
      %84 = vector.load %arg4[%c0_53, %c0_54, %c0_55] : memref<1x8x32xf32, #tpu.memory_space<vmem>>, vector<1x8x32xf32>
      %85 = vector.shape_cast %84 : vector<1x8x32xf32> to vector<8x32xf32>
      %c0_56 = arith.constant 0 : index
      %c0_57 = arith.constant 0 : index
      %86 = vector.load %arg6[%c0_56, %c0_57] : memref<32x32xf32, #tpu.memory_space<vmem>>, vector<32x32xf32>
      %cst_58 = arith.constant dense<0.000000e+00> : vector<8x32xf32>
      %87 = tpu.matmul %85, %86, %cst_58 {dimension_numbers = #tpu.dot_dimension_numbers<[1], [0], [0], [1], [0, 0, 1, 1], [], []>} : vector<8x32xf32>, vector<32x32xf32>, vector<8x32xf32> -> vector<8x32xf32>
      %88 = arith.negf %87 : vector<8x32xf32>
      %89 = math.exp %88 : vector<8x32xf32>
      %cst_59 = arith.constant 1.000000e+00 : f32
      %90 = vector.broadcast %cst_59 : f32 to vector<8x32xf32>
      %91 = arith.addf %90, %89 : vector<8x32xf32>
      %92 = arith.divf %90, %91 : vector<8x32xf32>
      %cst_60 = arith.constant 2.500000e-01 : f32
      %93 = vector.broadcast %cst_60 : f32 to vector<8x32xf32>
      %94 = arith.mulf %92, %93 : vector<8x32xf32>
      %c0_61 = arith.constant 0 : index
      %c0_62 = arith.constant 0 : index
      %95 = vector.load %arg10[%c0_61, %c0_62] : memref<8x32xf32, #tpu.memory_space<vmem>>, vector<8x32xf32>
      tpu.vector_store %arg10[%c0_61, %c0_62], %94 {strides = array<i32>} : memref<8x32xf32, #tpu.memory_space<vmem>>, vector<8x32xf32>,
      %cst_63 = arith.constant -1.000000e+30 : f32
      %96 = vector.broadcast %cst_63 : f32 to vector<2x8x1xf32>
      %c0_64 = arith.constant 0 : index
      %c0_65 = arith.constant 0 : index
      %c0_66 = arith.constant 0 : index
      %97 = vector.load %arg11[%c0_64, %c0_65, %c0_66] : memref<2x8x1xf32, #tpu.memory_space<vmem>>, vector<2x8x1xf32>
      tpu.vector_store %arg11[%c0_64, %c0_65, %c0_66], %96 {strides = array<i32>} : memref<2x8x1xf32, #tpu.memory_space<vmem>>, vector<2x8x1xf32>,
      %cst_67 = arith.constant 0.000000e+00 : f32
      %98 = vector.broadcast %cst_67 : f32 to vector<2x8x1xf32>
      %c0_68 = arith.constant 0 : index
      %c0_69 = arith.constant 0 : index
      %c0_70 = arith.constant 0 : index
      %99 = vector.load %arg12[%c0_68, %c0_69, %c0_70] : memref<2x8x1xf32, #tpu.memory_space<vmem>>, vector<2x8x1xf32>
      tpu.vector_store %arg12[%c0_68, %c0_69, %c0_70], %98 {strides = array<i32>} : memref<2x8x1xf32, #tpu.memory_space<vmem>>, vector<2x8x1xf32>,
      %cst_71 = arith.constant 0.000000e+00 : f32
      %100 = vector.broadcast %cst_71 : f32 to vector<2x8x16xf32>
      %c0_72 = arith.constant 0 : index
      %c0_73 = arith.constant 0 : index
      %c0_74 = arith.constant 0 : index
      %101 = vector.load %arg13[%c0_72, %c0_73, %c0_74] : memref<2x8x16xf32, #tpu.memory_space<vmem>>, vector<2x8x16xf32>
      tpu.vector_store %arg13[%c0_72, %c0_73, %c0_74], %100 {strides = array<i32>} : memref<2x8x16xf32, #tpu.memory_space<vmem>>, vector<2x8x16xf32>,
    } else {
    }
    %c0 = arith.constant 0 : index
    %c0_1 = arith.constant 0 : index
    %c0_2 = arith.constant 0 : index
    %3 = vector.load %arg3[%c0, %c0_1, %c0_2] : memref<1x8x32xf32, #tpu.memory_space<vmem>>, vector<1x8x32xf32>
    %4 = vector.shape_cast %3 : vector<1x8x32xf32> to vector<8x32xf32>
    %c0_3 = arith.constant 0 : index
    %c0_4 = arith.constant 0 : index
    %5 = vector.load %arg5[%c0_3, %c0_4] : memref<32x32xf32, #tpu.memory_space<vmem>>, vector<32x32xf32>
    %cst = arith.constant dense<0.000000e+00> : vector<8x32xf32>
    %6 = tpu.matmul %4, %5, %cst {dimension_numbers = #tpu.dot_dimension_numbers<[1], [0], [0], [1], [0, 0, 1, 1], [], []>} : vector<8x32xf32>, vector<32x32xf32>, vector<8x32xf32> -> vector<8x32xf32>
    %7 = arith.negf %6 : vector<8x32xf32>
    %8 = math.exp %7 : vector<8x32xf32>
    %cst_5 = arith.constant 1.000000e+00 : f32
    %9 = vector.broadcast %cst_5 : f32 to vector<8x32xf32>
    %10 = arith.addf %9, %8 : vector<8x32xf32>
    %11 = arith.divf %9, %10 : vector<8x32xf32>
    %c0_6 = arith.constant 0 : index
    %c0_7 = arith.constant 0 : index
    %12 = vector.load %arg10[%c0_6, %c0_7] : memref<8x32xf32, #tpu.memory_space<vmem>>, vector<8x32xf32>
    %13 = vector.extract_strided_slice %12 {offsets = [0, 0], sizes = [8, 16], strides = [1, 1]} : vector<8x32xf32> to vector<8x16xf32>
    %14 = vector.extract_strided_slice %11 {offsets = [0, 0], sizes = [8, 16], strides = [1, 1]} : vector<8x32xf32> to vector<8x16xf32>
    %cst_8 = arith.constant dense<0.000000e+00> : vector<8x8xf32>
    %15 = tpu.matmul %13, %14, %cst_8 {dimension_numbers = #tpu.dot_dimension_numbers<[1], [1], [0], [0], [0, 0, 1, 0], [], []>} : vector<8x16xf32>, vector<8x16xf32>, vector<8x8xf32> -> vector<8x8xf32>
    %c0_9 = arith.constant 0 : index
    %c0_10 = arith.constant 0 : index
    %c0_11 = arith.constant 0 : index
    %16 = vector.load %arg11[%c0_9, %c0_10, %c0_11] : memref<2x8x1xf32, #tpu.memory_space<vmem>>, vector<1x8x1xf32>
    %17 = vector.shape_cast %16 : vector<1x8x1xf32> to vector<8x1xf32>
    %cst_12 = arith.constant dense<0xFF800000> : vector<8xf32>
    %18 = vector.multi_reduction <maximumf>, %15, %cst_12 [1] : vector<8x8xf32> to vector<8xf32>
    %19 = vector.shape_cast %18 : vector<8xf32> to vector<8x1xf32>
    %20 = arith.maximumf %17, %19 : vector<8x1xf32>
    %21 = arith.subf %17, %20 : vector<8x1xf32>
    %22 = math.exp %21 : vector<8x1xf32>
    %23 = vector.broadcast %20 : vector<8x1xf32> to vector<8x8xf32>
    %24 = arith.subf %15, %23 : vector<8x8xf32>
    %25 = math.exp %24 : vector<8x8xf32>
    %c0_13 = arith.constant 0 : index
    %c0_14 = arith.constant 0 : index
    %c0_15 = arith.constant 0 : index
    %26 = vector.load %arg12[%c0_13, %c0_14, %c0_15] : memref<2x8x1xf32, #tpu.memory_space<vmem>>, vector<1x8x1xf32>
    %27 = vector.shape_cast %26 : vector<1x8x1xf32> to vector<8x1xf32>
    %28 = arith.mulf %22, %27 : vector<8x1xf32>
    %cst_16 = arith.constant dense<0.000000e+00> : vector<8xf32>
    %29 = vector.multi_reduction <add>, %25, %cst_16 [1] : vector<8x8xf32> to vector<8xf32>
    %30 = vector.shape_cast %29 : vector<8xf32> to vector<8x1xf32>
    %31 = arith.addf %28, %30 : vector<8x1xf32>
    %c0_17 = arith.constant 0 : index
    %c0_18 = arith.constant 0 : index
    %c0_19 = arith.constant 0 : index
    %32 = vector.load %arg12[%c0_17, %c0_18, %c0_19] : memref<2x8x1xf32, #tpu.memory_space<vmem>>, vector<1x8x1xf32>
    %33 = vector.shape_cast %32 : vector<1x8x1xf32> to vector<8x1xf32>
    %34 = vector.shape_cast %31 : vector<8x1xf32> to vector<1x8x1xf32>
    tpu.vector_store %arg12[%c0_17, %c0_18, %c0_19], %34 {strides = array<i32>} : memref<2x8x1xf32, #tpu.memory_space<vmem>>, vector<1x8x1xf32>,
    %c0_20 = arith.constant 0 : index
    %c0_21 = arith.constant 0 : index
    %c0_22 = arith.constant 0 : index
    %35 = vector.load %arg13[%c0_20, %c0_21, %c0_22] : memref<2x8x16xf32, #tpu.memory_space<vmem>>, vector<1x8x16xf32>
    %36 = vector.shape_cast %35 : vector<1x8x16xf32> to vector<8x16xf32>
    %37 = vector.broadcast %22 : vector<8x1xf32> to vector<8x16xf32>
    %38 = arith.mulf %37, %36 : vector<8x16xf32>
    %cst_23 = arith.constant dense<0.000000e+00> : vector<8x16xf32>
    %39 = tpu.matmul %25, %14, %cst_23 {dimension_numbers = #tpu.dot_dimension_numbers<[1], [0], [0], [1], [0, 0, 1, 1], [], []>} : vector<8x8xf32>, vector<8x16xf32>, vector<8x16xf32> -> vector<8x16xf32>
    %40 = arith.addf %38, %39 : vector<8x16xf32>
    %c0_24 = arith.constant 0 : index
    %c0_25 = arith.constant 0 : index
    %c0_26 = arith.constant 0 : index
    %41 = vector.load %arg13[%c0_24, %c0_25, %c0_26] : memref<2x8x16xf32, #tpu.memory_space<vmem>>, vector<1x8x16xf32>
    %42 = vector.shape_cast %41 : vector<1x8x16xf32> to vector<8x16xf32>
    %43 = vector.shape_cast %40 : vector<8x16xf32> to vector<1x8x16xf32>
    tpu.vector_store %arg13[%c0_24, %c0_25, %c0_26], %43 {strides = array<i32>} : memref<2x8x16xf32, #tpu.memory_space<vmem>>, vector<1x8x16xf32>,
    %c0_27 = arith.constant 0 : index
    %c0_28 = arith.constant 0 : index
    %c0_29 = arith.constant 0 : index
    %44 = vector.load %arg11[%c0_27, %c0_28, %c0_29] : memref<2x8x1xf32, #tpu.memory_space<vmem>>, vector<1x8x1xf32>
    %45 = vector.shape_cast %44 : vector<1x8x1xf32> to vector<8x1xf32>
    %46 = vector.shape_cast %20 : vector<8x1xf32> to vector<1x8x1xf32>
    tpu.vector_store %arg11[%c0_27, %c0_28, %c0_29], %46 {strides = array<i32>} : memref<2x8x1xf32, #tpu.memory_space<vmem>>, vector<1x8x1xf32>,
    %47 = vector.extract_strided_slice %12 {offsets = [0, 16], sizes = [8, 16], strides = [1, 1]} : vector<8x32xf32> to vector<8x16xf32>
    %48 = vector.extract_strided_slice %11 {offsets = [0, 16], sizes = [8, 16], strides = [1, 1]} : vector<8x32xf32> to vector<8x16xf32>
    %cst_30 = arith.constant dense<0.000000e+00> : vector<8x8xf32>
    %49 = tpu.matmul %47, %48, %cst_30 {dimension_numbers = #tpu.dot_dimension_numbers<[1], [1], [0], [0], [0, 0, 1, 0], [], []>} : vector<8x16xf32>, vector<8x16xf32>, vector<8x8xf32> -> vector<8x8xf32>
    %c1 = arith.constant 1 : index
    %c0_31 = arith.constant 0 : index
    %c0_32 = arith.constant 0 : index
    %50 = vector.load %arg11[%c1, %c0_31, %c0_32] : memref<2x8x1xf32, #tpu.memory_space<vmem>>, vector<1x8x1xf32>
    %51 = vector.shape_cast %50 : vector<1x8x1xf32> to vector<8x1xf32>
    %cst_33 = arith.constant dense<0xFF800000> : vector<8xf32>
    %52 = vector.multi_reduction <maximumf>, %49, %cst_33 [1] : vector<8x8xf32> to vector<8xf32>
    %53 = vector.shape_cast %52 : vector<8xf32> to vector<8x1xf32>
    %54 = arith.maximumf %51, %53 : vector<8x1xf32>
    %55 = arith.subf %51, %54 : vector<8x1xf32>
    %56 = math.exp %55 : vector<8x1xf32>
    %57 = vector.broadcast %54 : vector<8x1xf32> to vector<8x8xf32>
    %58 = arith.subf %49, %57 : vector<8x8xf32>
    %59 = math.exp %58 : vector<8x8xf32>
    %c1_34 = arith.constant 1 : index
    %c0_35 = arith.constant 0 : index
    %c0_36 = arith.constant 0 : index
    %60 = vector.load %arg12[%c1_34, %c0_35, %c0_36] : memref<2x8x1xf32, #tpu.memory_space<vmem>>, vector<1x8x1xf32>
    %61 = vector.shape_cast %60 : vector<1x8x1xf32> to vector<8x1xf32>
    %62 = arith.mulf %56, %61 : vector<8x1xf32>
    %cst_37 = arith.constant dense<0.000000e+00> : vector<8xf32>
    %63 = vector.multi_reduction <add>, %59, %cst_37 [1] : vector<8x8xf32> to vector<8xf32>
    %64 = vector.shape_cast %63 : vector<8xf32> to vector<8x1xf32>
    %65 = arith.addf %62, %64 : vector<8x1xf32>
    %c1_38 = arith.constant 1 : index
    %c0_39 = arith.constant 0 : index
    %c0_40 = arith.constant 0 : index
    %66 = vector.load %arg12[%c1_38, %c0_39, %c0_40] : memref<2x8x1xf32, #tpu.memory_space<vmem>>, vector<1x8x1xf32>
    %67 = vector.shape_cast %66 : vector<1x8x1xf32> to vector<8x1xf32>
    %68 = vector.shape_cast %65 : vector<8x1xf32> to vector<1x8x1xf32>
    tpu.vector_store %arg12[%c1_38, %c0_39, %c0_40], %68 {strides = array<i32>} : memref<2x8x1xf32, #tpu.memory_space<vmem>>, vector<1x8x1xf32>,
    %c1_41 = arith.constant 1 : index
    %c0_42 = arith.constant 0 : index
    %c0_43 = arith.constant 0 : index
    %69 = vector.load %arg13[%c1_41, %c0_42, %c0_43] : memref<2x8x16xf32, #tpu.memory_space<vmem>>, vector<1x8x16xf32>
    %70 = vector.shape_cast %69 : vector<1x8x16xf32> to vector<8x16xf32>
    %71 = vector.broadcast %56 : vector<8x1xf32> to vector<8x16xf32>
    %72 = arith.mulf %71, %70 : vector<8x16xf32>
    %cst_44 = arith.constant dense<0.000000e+00> : vector<8x16xf32>
    %73 = tpu.matmul %59, %48, %cst_44 {dimension_numbers = #tpu.dot_dimension_numbers<[1], [0], [0], [1], [0, 0, 1, 1], [], []>} : vector<8x8xf32>, vector<8x16xf32>, vector<8x16xf32> -> vector<8x16xf32>
    %74 = arith.addf %72, %73 : vector<8x16xf32>
    %c1_45 = arith.constant 1 : index
    %c0_46 = arith.constant 0 : index
    %c0_47 = arith.constant 0 : index
    %75 = vector.load %arg13[%c1_45, %c0_46, %c0_47] : memref<2x8x16xf32, #tpu.memory_space<vmem>>, vector<1x8x16xf32>
    %76 = vector.shape_cast %75 : vector<1x8x16xf32> to vector<8x16xf32>
    %77 = vector.shape_cast %74 : vector<8x16xf32> to vector<1x8x16xf32>
    tpu.vector_store %arg13[%c1_45, %c0_46, %c0_47], %77 {strides = array<i32>} : memref<2x8x16xf32, #tpu.memory_space<vmem>>, vector<1x8x16xf32>,
    %c1_48 = arith.constant 1 : index
    %c0_49 = arith.constant 0 : index
    %c0_50 = arith.constant 0 : index
    %78 = vector.load %arg11[%c1_48, %c0_49, %c0_50] : memref<2x8x1xf32, #tpu.memory_space<vmem>>, vector<1x8x1xf32>
    %79 = vector.shape_cast %78 : vector<1x8x1xf32> to vector<8x1xf32>
    %80 = vector.shape_cast %54 : vector<8x1xf32> to vector<1x8x1xf32>
    tpu.vector_store %arg11[%c1_48, %c0_49, %c0_50], %80 {strides = array<i32>} : memref<2x8x1xf32, #tpu.memory_space<vmem>>, vector<1x8x1xf32>,
    %c0_i32_51 = arith.constant 0 : i32
    %81 = arith.cmpi eq, %arg2, %c0_i32_51 : i32
    %82 = arith.extui %81 : i1 to i32
    %c0_i32_52 = arith.constant 0 : i32
    %83 = arith.cmpi ne, %82, %c0_i32_52 : i32
    scf.if %83 {
      %c0_53 = arith.constant 0 : index
      %c0_54 = arith.constant 0 : index
      %84 = vector.load %arg7[%c0_53, %c0_54] : memref<32x128xf32, #tpu.memory_space<vmem>>, vector<32x128xf32>
      %c0_55 = arith.constant 0 : index
      %c0_56 = arith.constant 0 : index
      %c0_57 = arith.constant 0 : index
      %85 = vector.load %arg13[%c0_55, %c0_56, %c0_57] : memref<2x8x16xf32, #tpu.memory_space<vmem>>, vector<1x8x16xf32>
      %86 = vector.shape_cast %85 : vector<1x8x16xf32> to vector<8x16xf32>
      %c0_58 = arith.constant 0 : index
      %c0_59 = arith.constant 0 : index
      %c0_60 = arith.constant 0 : index
      %87 = vector.load %arg12[%c0_58, %c0_59, %c0_60] : memref<2x8x1xf32, #tpu.memory_space<vmem>>, vector<1x8x1xf32>
      %88 = vector.shape_cast %87 : vector<1x8x1xf32> to vector<8x1xf32>
      %89 = vector.broadcast %88 : vector<8x1xf32> to vector<8x16xf32>
      %90 = arith.divf %86, %89 : vector<8x16xf32>
      %91 = vector.extract_strided_slice %84 {offsets = [0, 0], sizes = [16, 128], strides = [1, 1]} : vector<32x128xf32> to vector<16x128xf32>
      %cst_61 = arith.constant dense<0.000000e+00> : vector<8x128xf32>
      %92 = tpu.matmul %90, %91, %cst_61 {dimension_numbers = #tpu.dot_dimension_numbers<[1], [0], [0], [1], [0, 0, 1, 1], [], []>} : vector<8x16xf32>, vector<16x128xf32>, vector<8x128xf32> -> vector<8x128xf32>
      %c1_62 = arith.constant 1 : index
      %c0_63 = arith.constant 0 : index
      %c0_64 = arith.constant 0 : index
      %93 = vector.load %arg13[%c1_62, %c0_63, %c0_64] : memref<2x8x16xf32, #tpu.memory_space<vmem>>, vector<1x8x16xf32>
      %94 = vector.shape_cast %93 : vector<1x8x16xf32> to vector<8x16xf32>
      %c1_65 = arith.constant 1 : index
      %c0_66 = arith.constant 0 : index
      %c0_67 = arith.constant 0 : index
      %95 = vector.load %arg12[%c1_65, %c0_66, %c0_67] : memref<2x8x1xf32, #tpu.memory_space<vmem>>, vector<1x8x1xf32>
      %96 = vector.shape_cast %95 : vector<1x8x1xf32> to vector<8x1xf32>
      %97 = vector.broadcast %96 : vector<8x1xf32> to vector<8x16xf32>
      %98 = arith.divf %94, %97 : vector<8x16xf32>
      %99 = vector.extract_strided_slice %84 {offsets = [16, 0], sizes = [16, 128], strides = [1, 1]} : vector<32x128xf32> to vector<16x128xf32>
      %cst_68 = arith.constant dense<0.000000e+00> : vector<8x128xf32>
      %100 = tpu.matmul %98, %99, %cst_68 {dimension_numbers = #tpu.dot_dimension_numbers<[1], [0], [0], [1], [0, 0, 1, 1], [], []>} : vector<8x16xf32>, vector<16x128xf32>, vector<8x128xf32> -> vector<8x128xf32>
      %101 = arith.addf %92, %100 : vector<8x128xf32>
      %c0_69 = arith.constant 0 : index
      %c0_70 = arith.constant 0 : index
      %102 = vector.load %arg8[%c0_69, %c0_70] : memref<1x128xf32, #tpu.memory_space<vmem>>, vector<1x128xf32>
      %103 = vector.broadcast %102 : vector<1x128xf32> to vector<8x128xf32>
      %104 = arith.addf %101, %103 : vector<8x128xf32>
      %c0_71 = arith.constant 0 : index
      %c0_72 = arith.constant 0 : index
      %c0_73 = arith.constant 0 : index
      %105 = vector.load %arg9[%c0_71, %c0_72, %c0_73] : memref<1x8x128xf32, #tpu.memory_space<vmem>>, vector<1x8x128xf32>
      %106 = vector.shape_cast %105 : vector<1x8x128xf32> to vector<8x128xf32>
      %107 = vector.shape_cast %104 : vector<8x128xf32> to vector<1x8x128xf32>
      tpu.vector_store %arg9[%c0_71, %c0_72, %c0_73], %107 {strides = array<i32>} : memref<1x8x128xf32, #tpu.memory_space<vmem>>, vector<1x8x128xf32>,
    } else {
    }
    return
  }
  func.func @transform_0(%arg0: i32, %arg1: i32, %arg2: i32) -> (i32, i32, i32) {
    %c0_i32 = arith.constant 0 : i32
    %c0_i32_0 = arith.constant 0 : i32
    return %arg0, %arg2, %c0_i32 : i32, i32, i32
  }
  func.func @transform_1(%arg0: i32, %arg1: i32, %arg2: i32) -> (i32, i32, i32) {
    %c0_i32 = arith.constant 0 : i32
    %c0_i32_0 = arith.constant 0 : i32
    return %arg0, %arg1, %c0_i32 : i32, i32, i32
  }
  func.func @transform_2(%arg0: i32, %arg1: i32, %arg2: i32) -> (i32, i32) {
    %c0_i32 = arith.constant 0 : i32
    %c0_i32_0 = arith.constant 0 : i32
    %c0_i32_1 = arith.constant 0 : i32
    return %c0_i32, %c0_i32_0 : i32, i32
  }
  func.func @transform_3(%arg0: i32, %arg1: i32, %arg2: i32) -> (i32, i32) {
    %c0_i32 = arith.constant 0 : i32
    %c0_i32_0 = arith.constant 0 : i32
    %c0_i32_1 = arith.constant 0 : i32
    return %c0_i32, %c0_i32_0 : i32, i32
  }
  func.func @transform_4(%arg0: i32, %arg1: i32, %arg2: i32) -> (i32, i32) {
    %c0_i32 = arith.constant 0 : i32
    %c0_i32_0 = arith.constant 0 : i32
    %c0_i32_1 = arith.constant 0 : i32
    return %c0_i32, %c0_i32_0 : i32, i32
  }
  func.func @transform_5(%arg0: i32, %arg1: i32, %arg2: i32) -> (i32, i32) {
    %c0_i32 = arith.constant 0 : i32
    %c0_i32_0 = arith.constant 0 : i32
    %c0_i32_1 = arith.constant 0 : i32
    return %c0_i32, %c0_i32_0 : i32, i32
  }
  func.func @transform_6(%arg0: i32, %arg1: i32, %arg2: i32) -> (i32, i32, i32) {
    %c0_i32 = arith.constant 0 : i32
    %c0_i32_0 = arith.constant 0 : i32
    return %arg0, %arg1, %c0_i32 : i32, i32, i32
  }
}

</mosaic_0001>

<llo_original>
// kernel: tpu_custom_call.1
$region0: #{tpu_custom_call.1}
  #allocation0 [shape = 'u32[]', space=smem, size = 0x4, offset = 0x4, fixed_abs, tag = 'smem constant byte address 0x4 - core index']
  #allocation1 [shape = 'u32[144,128]{1,0:T(1,128)}', space=vmem, size = 0x12000, scoped, tag = 'internal scratch']
  #allocation2 [shape = 'f32[8,32]{1,0:T(8,128)}', space=vmem, size = 0x1000, scoped, tag = 'scratch operand']
  #allocation3 [shape = 'f32[2,8,1]{2,1,0:T(8,128)}', space=vmem, size = 0x2000, scoped, tag = 'scratch operand']
  #allocation4 [shape = 'f32[2,8,1]{2,1,0:T(8,128)}', space=vmem, size = 0x2000, scoped, tag = 'scratch operand']
  #allocation5 [shape = 'f32[2,8,16]{2,1,0:T(8,128)}', space=vmem, size = 0x2000, scoped, tag = 'scratch operand']
  %s0 = inlined_call_operand.hbm [shape: f32[2,8,32], index: 0, kind: input, shape index: {}]
  %s1 = inlined_call_operand.hbm [shape: f32[2,8,32], index: 1, kind: input, shape index: {}]
  %s2 = inlined_call_operand.hbm [shape: f32[32,32], index: 2, kind: input, shape index: {}]
  %s3 = inlined_call_operand.hbm [shape: f32[32,32], index: 3, kind: input, shape index: {}]
  %s4 = inlined_call_operand.hbm [shape: f32[32,128], index: 4, kind: input, shape index: {}]
  %s5 = inlined_call_operand.vmem [shape: f32[1,128], index: 5, kind: input, shape index: {}]
  %s6 = inlined_call_operand.hbm [shape: f32[2,8,128], index: 6, kind: output, shape index: {}]
  %s7 = sld [smem:[#allocation0]]
  $region85: #{tpu_custom_call.1} parent=0
    _
  %s9 = ssub.s32 1, %s7
  %s10 = scalar_select 0, %s9, %s7
  $region1: #{tpu_custom_call.1} parent=0
    #allocation6 [shape = 'u8[8192]{0}', space=vmem, size = 0x2000, scoped, tag = 'input window, operand 0']
    #allocation7 [shape = 's32[2]{0}', space=sflag, size = 0x8, scoped, tag = 'scoped memory for tpu_custom_call.1']
    #allocation8 [shape = 's32[2]{0}', space=sflag, size = 0x8, scoped, tag = 'scoped memory for tpu_custom_call.1']
    #allocation9 [shape = 'u8[8192]{0}', space=vmem, size = 0x2000, scoped, tag = 'input window, operand 1']
    #allocation10 [shape = 's32[2]{0}', space=sflag, size = 0x8, scoped, tag = 'scoped memory for tpu_custom_call.1']
    #allocation11 [shape = 'u8[16384]{0}', space=vmem, size = 0x4000, scoped, tag = 'input window, operand 2, single buffered']
    #allocation12 [shape = 'u8[16384]{0}', space=vmem, size = 0x4000, scoped, tag = 'input window, operand 3, single buffered']
    #allocation13 [shape = 's32[1]{0}', space=sflag, size = 0x4, scoped, tag = 'scoped memory for tpu_custom_call.1']
    #allocation14 [shape = 'u8[16384]{0}', space=vmem, size = 0x4000, scoped, tag = 'input window, operand 4, single buffered']
    #allocation15 [shape = 'u8[8192]{0}', space=vmem, size = 0x2000, scoped, tag = 'output window, operand 0']
    %11 = vsyncpa [#allocation7], 0
    %s12 = scalar_lea.sflag [#allocation7], 1
    %13 = vsyncpa %s12, 0
    %14 = vsyncpa [#allocation10], 0
    %s15 = scalar_lea.sflag [#allocation10], 1
    %16 = vsyncpa %s15, 0
    %17 = vsyncpa [#allocation13], 0
    %18 = vsyncpa [#allocation8], 0
    %s19 = scalar_lea.sflag [#allocation8], 1
    %20 = vsyncpa %s19, 0
    loop: start=0, step=1, limit=4
    $region2: #{tpu_custom_call.1} parent=1 // loop_pre_header
      _
    $region3: #{tpu_custom_call.1} parent=1 // loop_header
      %s22 = sphi 0, %s26
      %p23 = scmp.ge.s32.totalorder %s22, 4
      %s29 = sphi 0, %s48
      %s30 = sphi 0, %s44
      %s31 = sphi 0, %s40
      %s32 = sphi 0, %s29
      %s33 = sphi 0, %s30
      %s34 = sphi 0, %s31
      %s35 = sphi 0, %s32
      %s36 = sphi 0, %s33
      %s37 = sphi 0, %s34
      %s53 = sphi 0, %s55
      %s56 = sphi 0, %s53
      %s57 = sphi 0, %s56
      %s73 = sphi 0, %s57
      %s81 = sphi 0, %s83
      %s84 = sphi 0, %s81
      %s85 = sphi 0, %s84
      %s101 = sphi 0, %s85
      %s105 = sphi 0, %s105
      %s107 = sphi 0, %s105
      %s108 = sphi 0, %s107
      %s122 = sphi 0, %s108
      %s126 = sphi 0, %s126
      %s128 = sphi 0, %s126
      %s129 = sphi 0, %s128
      %s143 = sphi 0, %s129
      %s147 = sphi 0, %s147
      %s149 = sphi 0, %s147
      %s150 = sphi 0, %s149
      %s164 = sphi 0, %s150
      %s168 = sphi 0, %s168
      %s170 = sphi 0, %s168
      %s171 = sphi 0, %s170
      %s185 = sphi 0, %s171
      %s193 = sphi 0, %s195
      %s196 = sphi 0, %s193
      %s197 = sphi 0, %s196
      %s213 = sphi 0, %s197
    $region4: #{tpu_custom_call.1} parent=1 // loop_header_branch
      %25 = sbr.rel (%p23) target = $region8
    $region5: #{tpu_custom_call.1} parent=1 // loop_body
      %s27 = ssub.s32 %s22, 1
      %s28 = ssub.s32 %s22, 2
      %s38 = sadd.s32 1, %s31
      %p39 = scmp.ge.s32.totalorder %s38, 1
      %s40 = scalar_select %p39, 0, %s38
      %s41 = sadd.s32 1, %s30
      %s42 = scalar_select %p39, %s41, %s30
      %p43 = scmp.ge.s32.totalorder %s42, 1
      %s44 = scalar_select %p43, 0, %s42
      %s45 = sadd.s32 1, %s29
      %s46 = scalar_select %p43, %s45, %s29
      %p47 = scmp.ge.s32.totalorder %s46, 2
      %s48 = scalar_select %p47, 0, %s46
      %s49 = ssub.s32 %s29, %s48
      %s50 = ssub.s32 %s31, %s40
      %s51 = sor.u32 %s49, %s50
      %p52 = scmp.eq.s32.totalorder %s51, 0
      %s54 = sadd.s32 %s53, 1
      %s55 = scalar_select %p52, %s53, %s54
      %p58 = pneg %p52
      %p59 = scmp.eq.s32.totalorder %s22, 1
      %p60 = por %p58, %p59
      %p61 = scmp.ne.s32.totalorder %s53, %s56
      %p62 = scmp.eq.s32.totalorder %s22, 0
      %p63 = por %p61, %p62
      %p64 = scmp.ne.s32.totalorder %s53, %s56
      %p65 = scmp.eq.s32.totalorder %s27, 1
      %p66 = por %p64, %p65
      %p67 = scmp.ne.s32.totalorder %s56, %s57
      %p68 = scmp.eq.s32.totalorder %s27, 0
      %p69 = por %p67, %p68
      %p70 = scmp.ne.s32.totalorder %s56, %s57
      %p71 = scmp.eq.s32.totalorder %s28, 1
      %p72 = por %p70, %p71
      %p74 = scmp.ne.s32.totalorder %s57, %s73
      %p75 = scmp.eq.s32.totalorder %s28, 0
      %p76 = por %p74, %p75
      %s77 = ssub.s32 %s29, %s48
      %s78 = ssub.s32 %s30, %s44
      %s79 = sor.u32 %s77, %s78
      %p80 = scmp.eq.s32.totalorder %s79, 0
      %s82 = sadd.s32 %s81, 1
      %s83 = scalar_select %p80, %s81, %s82
      %p86 = pneg %p80
      %p87 = scmp.eq.s32.totalorder %s22, 1
      %p88 = por %p86, %p87
      %p89 = scmp.ne.s32.totalorder %s81, %s84
      %p90 = scmp.eq.s32.totalorder %s22, 0
      %p91 = por %p89, %p90
      %p92 = scmp.ne.s32.totalorder %s81, %s84
      %p93 = scmp.eq.s32.totalorder %s27, 1
      %p94 = por %p92, %p93
      %p95 = scmp.ne.s32.totalorder %s84, %s85
      %p96 = scmp.eq.s32.totalorder %s27, 0
      %p97 = por %p95, %p96
      %p98 = scmp.ne.s32.totalorder %s84, %s85
      %p99 = scmp.eq.s32.totalorder %s28, 1
      %p100 = por %p98, %p99
      %p102 = scmp.ne.s32.totalorder %s85, %s101
      %p103 = scmp.eq.s32.totalorder %s28, 0
      %p104 = por %p102, %p103
      %s106 = sadd.s32 %s105, 1
      %p109 = scmp.eq.s32.totalorder %s22, 1
      %p110 = scmp.ne.s32.totalorder %s105, %s107
      %p111 = scmp.eq.s32.totalorder %s22, 0
      %p112 = por %p110, %p111
      %p113 = scmp.ne.s32.totalorder %s105, %s107
      %p114 = scmp.eq.s32.totalorder %s27, 1
      %p115 = por %p113, %p114
      %p116 = scmp.ne.s32.totalorder %s107, %s108
      %p117 = scmp.eq.s32.totalorder %s27, 0
      %p118 = por %p116, %p117
      %p119 = scmp.ne.s32.totalorder %s107, %s108
      %p120 = scmp.eq.s32.totalorder %s28, 1
      %p121 = por %p119, %p120
      %p123 = scmp.ne.s32.totalorder %s108, %s122
      %p124 = scmp.eq.s32.totalorder %s28, 0
      %p125 = por %p123, %p124
      %s127 = sadd.s32 %s126, 1
      %p130 = scmp.eq.s32.totalorder %s22, 1
      %p131 = scmp.ne.s32.totalorder %s126, %s128
      %p132 = scmp.eq.s32.totalorder %s22, 0
      %p133 = por %p131, %p132
      %p134 = scmp.ne.s32.totalorder %s126, %s128
      %p135 = scmp.eq.s32.totalorder %s27, 1
      %p136 = por %p134, %p135
      %p137 = scmp.ne.s32.totalorder %s128, %s129
      %p138 = scmp.eq.s32.totalorder %s27, 0
      %p139 = por %p137, %p138
      %p140 = scmp.ne.s32.totalorder %s128, %s129
      %p141 = scmp.eq.s32.totalorder %s28, 1
      %p142 = por %p140, %p141
      %p144 = scmp.ne.s32.totalorder %s129, %s143
      %p145 = scmp.eq.s32.totalorder %s28, 0
      %p146 = por %p144, %p145
      %s148 = sadd.s32 %s147, 1
      %p151 = scmp.eq.s32.totalorder %s22, 1
      %p152 = scmp.ne.s32.totalorder %s147, %s149
      %p153 = scmp.eq.s32.totalorder %s22, 0
      %p154 = por %p152, %p153
      %p155 = scmp.ne.s32.totalorder %s147, %s149
      %p156 = scmp.eq.s32.totalorder %s27, 1
      %p157 = por %p155, %p156
      %p158 = scmp.ne.s32.totalorder %s149, %s150
      %p159 = scmp.eq.s32.totalorder %s27, 0
      %p160 = por %p158, %p159
      %p161 = scmp.ne.s32.totalorder %s149, %s150
      %p162 = scmp.eq.s32.totalorder %s28, 1
      %p163 = por %p161, %p162
      %p165 = scmp.ne.s32.totalorder %s150, %s164
      %p166 = scmp.eq.s32.totalorder %s28, 0
      %p167 = por %p165, %p166
      %s169 = sadd.s32 %s168, 1
      %p172 = scmp.eq.s32.totalorder %s22, 1
      %p173 = scmp.ne.s32.totalorder %s168, %s170
      %p174 = scmp.eq.s32.totalorder %s22, 0
      %p175 = por %p173, %p174
      %p176 = scmp.ne.s32.totalorder %s168, %s170
      %p177 = scmp.eq.s32.totalorder %s27, 1
      %p178 = por %p176, %p177
      %p179 = scmp.ne.s32.totalorder %s170, %s171
      %p180 = scmp.eq.s32.totalorder %s27, 0
      %p181 = por %p179, %p180
      %p182 = scmp.ne.s32.totalorder %s170, %s171
      %p183 = scmp.eq.s32.totalorder %s28, 1
      %p184 = por %p182, %p183
      %p186 = scmp.ne.s32.totalorder %s171, %s185
      %p187 = scmp.eq.s32.totalorder %s28, 0
      %p188 = por %p186, %p187
      %s189 = ssub.s32 %s29, %s48
      %s190 = ssub.s32 %s30, %s44
      %s191 = sor.u32 %s189, %s190
      %p192 = scmp.eq.s32.totalorder %s191, 0
      %s194 = sadd.s32 %s193, 1
      %s195 = scalar_select %p192, %s193, %s194
      %p198 = pneg %p192
      %p199 = scmp.eq.s32.totalorder %s22, 1
      %p200 = por %p198, %p199
      %p201 = scmp.ne.s32.totalorder %s193, %s196
      %p202 = scmp.eq.s32.totalorder %s22, 0
      %p203 = por %p201, %p202
      %p204 = scmp.ne.s32.totalorder %s193, %s196
      %p205 = scmp.eq.s32.totalorder %s27, 1
      %p206 = por %p204, %p205
      %p207 = scmp.ne.s32.totalorder %s196, %s197
      %p208 = scmp.eq.s32.totalorder %s27, 0
      %p209 = por %p207, %p208
      %p210 = scmp.ne.s32.totalorder %s196, %s197
      %p211 = scmp.eq.s32.totalorder %s28, 1
      %p212 = por %p210, %p211
      %p214 = scmp.ne.s32.totalorder %s197, %s213
      %p215 = scmp.eq.s32.totalorder %s28, 0
      %p216 = por %p214, %p215
      %p217 = scmp.le.s32.totalorder 1, %s22
      %p218 = scmp.lt.s32.totalorder %s22, 3
      %p219 = pnand %p217, %p218
      %p220 = pneg %p219
      // Predicated region
      $region9: #{tpu_custom_call.1} parent=5 // pred_check
        _
      $region10: #{tpu_custom_call.1} parent=5 // pred_check_branch
        %222 = sbr.rel (%p219) target = $region12
      $region11: #{tpu_custom_call.1} parent=5 // pred_region
        %s223 = ssub.s32 %s22, 1
        // Predicated region
        $region13: #{tpu_custom_call.1} parent=11 // pred_check
          %p224 = pneg %p118
        $region14: #{tpu_custom_call.1} parent=11 // pred_check_branch
          %226 = sbr.rel (%p224) target = $region16
        $region15: #{tpu_custom_call.1} parent=11 // pred_region
          %s228 = ssub.s32 512, 512
          %229 = vsyncadd [#allocation10], %s228
          %s230 = sshll.u32 [#allocation11], 4
          %s231 = int_to_ptr.vmem [resolvable:$true] %s230
          %236 = dma.hbm_to_vmem [thread:$0]  %s2, 512, %s231, [#allocation10], 128, 128, 8
        $region16: #{tpu_custom_call.1} parent=11 // pred_fallthru
          _
        // Predicated region
        $region17: #{tpu_custom_call.1} parent=11 // pred_check
          %p237 = pneg %p139
        $region18: #{tpu_custom_call.1} parent=11 // pred_check_branch
          %239 = sbr.rel (%p237) target = $region20
        $region19: #{tpu_custom_call.1} parent=11 // pred_region
          %s241 = ssub.s32 512, 512
          %242 = vsyncadd [#allocation13], %s241
          %s243 = sshll.u32 [#allocation12], 4
          %s244 = int_to_ptr.vmem [resolvable:$true] %s243
          %249 = dma.hbm_to_vmem [thread:$0]  %s3, 512, %s244, [#allocation13], 128, 128, 8
        $region20: #{tpu_custom_call.1} parent=11 // pred_fallthru
          _
        // Predicated region
        $region21: #{tpu_custom_call.1} parent=11 // pred_check
          %p250 = pneg %p160
        $region22: #{tpu_custom_call.1} parent=11 // pred_check_branch
          %252 = sbr.rel (%p250) target = $region24
        $region23: #{tpu_custom_call.1} parent=11 // pred_region
          %s254 = ssub.s32 512, 512
          %255 = vsyncadd [#allocation13], %s254
          %s256 = sshll.u32 [#allocation14], 4
          %s257 = int_to_ptr.vmem [resolvable:$true] %s256
          %262 = dma.hbm_to_vmem [thread:$0]  %s4, 512, %s257, [#allocation13], 128, 128, 8
        $region24: #{tpu_custom_call.1} parent=11 // pred_fallthru
          _
        // Predicated region
        $region25: #{tpu_custom_call.1} parent=11 // pred_check
          %p263 = pneg %p181
        $region26: #{tpu_custom_call.1} parent=11 // pred_check_branch
          %265 = sbr.rel (%p263) target = $region28
        $region27: #{tpu_custom_call.1} parent=11 // pred_region
          _
        $region28: #{tpu_custom_call.1} parent=11 // pred_fallthru
          _
      $region12: #{tpu_custom_call.1} parent=5 // pred_fallthru
        _
      %p266 = scmp.lt.s32.totalorder %s22, 2
      // Predicated region
      $region29: #{tpu_custom_call.1} parent=5 // pred_check
        %p267 = pneg %p266
      $region30: #{tpu_custom_call.1} parent=5 // pred_check_branch
        %269 = sbr.rel (%p267) target = $region32
      $region31: #{tpu_custom_call.1} parent=5 // pred_region
        // Predicated region
        $region33: #{tpu_custom_call.1} parent=31 // pred_check
          %p270 = pneg %p63
        $region34: #{tpu_custom_call.1} parent=31 // pred_check_branch
          %272 = sbr.rel (%p270) target = $region36
        $region35: #{tpu_custom_call.1} parent=31 // pred_region
          %s273 = sand.u32 %s53, 1
          %s274 = scalar_lea.sflag [#allocation7], %s273
          %s275 = sand.u32 %s53, 1
          %s276 = smul.addr %s275, 8
          %s277 = scalar_lea.vmem [#allocation6], %s276
          %s279 = ssub.s32 128, 128
          %280 = vsyncadd %s274, %s279
          %s281 = sadd.s32 %s31, %s29
          %s282 = smul.addr %s281, 128
          %s283 = scalar_lea.hbm %s0, %s282
          %s285 = sshll.u32 %s277, 4
          %s286 = int_to_ptr.vmem [resolvable:$true] %s285
          %288 = dma.hbm_to_vmem [thread:$0]  %s283, 128, %s286, %s274
        $region36: #{tpu_custom_call.1} parent=31 // pred_fallthru
          _
        // Predicated region
        $region37: #{tpu_custom_call.1} parent=31 // pred_check
          %p289 = pneg %p91
        $region38: #{tpu_custom_call.1} parent=31 // pred_check_branch
          %291 = sbr.rel (%p289) target = $region40
        $region39: #{tpu_custom_call.1} parent=31 // pred_region
          %s292 = sand.u32 %s22, 1
          %s293 = scalar_lea.sflag [#allocation10], %s292
          %s294 = sand.u32 %s81, 1
          %s295 = smul.addr %s294, 8
          %s296 = scalar_lea.vmem [#allocation9], %s295
          %s298 = ssub.s32 128, 128
          %299 = vsyncadd %s293, %s298
          %s300 = sadd.s32 %s30, %s29
          %s301 = smul.addr %s300, 128
          %s302 = scalar_lea.hbm %s1, %s301
          %s304 = sshll.u32 %s296, 4
          %s305 = int_to_ptr.vmem [resolvable:$true] %s304
          %307 = dma.hbm_to_vmem [thread:$0]  %s302, 128, %s305, %s293
        $region40: #{tpu_custom_call.1} parent=31 // pred_fallthru
          _
      $region32: #{tpu_custom_call.1} parent=5 // pred_fallthru
        _
      %p308 = scmp.le.s32.totalorder 1, %s22
      %p309 = scmp.lt.s32.totalorder %s22, 3
      %p310 = pnand %p308, %p309
      %p311 = pneg %p310
      // Predicated region
      $region41: #{tpu_custom_call.1} parent=5 // pred_check
        _
      $region42: #{tpu_custom_call.1} parent=5 // pred_check_branch
        %313 = sbr.rel (%p310) target = $region44
      $region43: #{tpu_custom_call.1} parent=5 // pred_region
        %s314 = ssub.s32 %s22, 1
        %s315 = sand.u32 %s56, 1
        %s316 = scalar_lea.sflag [#allocation7], %s315
        %s317 = sand.u32 %s56, 1
        %s318 = smul.addr %s317, 8
        %s319 = scalar_lea.vmem [#allocation6], %s318
        // Predicated region
        $region45: #{tpu_custom_call.1} parent=43 // pred_check
          %p320 = pneg %p69
        $region46: #{tpu_custom_call.1} parent=43 // pred_check_branch
          %322 = sbr.rel (%p320) target = $region48
        $region47: #{tpu_custom_call.1} parent=43 // pred_region
          %323 = dma.done %s316, 128
        $region48: #{tpu_custom_call.1} parent=43 // pred_fallthru
          _
        %s324 = sand.u32 %s27, 1
        %s325 = scalar_lea.sflag [#allocation10], %s324
        %s326 = sand.u32 %s84, 1
        %s327 = smul.addr %s326, 8
        %s328 = scalar_lea.vmem [#allocation9], %s327
        // Predicated region
        $region49: #{tpu_custom_call.1} parent=43 // pred_check
          %p329 = pneg %p97
        $region50: #{tpu_custom_call.1} parent=43 // pred_check_branch
          %331 = sbr.rel (%p329) target = $region52
        $region51: #{tpu_custom_call.1} parent=43 // pred_region
          %332 = dma.done %s325, 128
        $region52: #{tpu_custom_call.1} parent=43 // pred_fallthru
          _
        // Predicated region
        $region53: #{tpu_custom_call.1} parent=43 // pred_check
          %p333 = pneg %p118
        $region54: #{tpu_custom_call.1} parent=43 // pred_check_branch
          %335 = sbr.rel (%p333) target = $region56
        $region55: #{tpu_custom_call.1} parent=43 // pred_region
          %336 = dma.done [#allocation10], 512
        $region56: #{tpu_custom_call.1} parent=43 // pred_fallthru
          _
        // Predicated region
        $region57: #{tpu_custom_call.1} parent=43 // pred_check
          %p337 = pneg %p139
        $region58: #{tpu_custom_call.1} parent=43 // pred_check_branch
          %339 = sbr.rel (%p337) target = $region60
        $region59: #{tpu_custom_call.1} parent=43 // pred_region
          %340 = dma.done [#allocation13], 512
        $region60: #{tpu_custom_call.1} parent=43 // pred_fallthru
          _
        // Predicated region
        $region61: #{tpu_custom_call.1} parent=43 // pred_check
          %p341 = pneg %p160
        $region62: #{tpu_custom_call.1} parent=43 // pred_check_branch
          %343 = sbr.rel (%p341) target = $region64
        $region63: #{tpu_custom_call.1} parent=43 // pred_region
          %344 = dma.done [#allocation13], 512
        $region64: #{tpu_custom_call.1} parent=43 // pred_fallthru
          _
        %s345 = sand.u32 %s56, 1
        %s346 = scalar_lea.sflag [#allocation7], %s345
        %s347 = sand.u32 %s56, 1
        %s348 = smul.addr %s347, 8
        %s349 = scalar_lea.vmem [#allocation6], %s348
        %p350 = pneg %p69
        %p351 = pneg %p66
        %s352 = sand.u32 %s27, 1
        %s353 = scalar_lea.sflag [#allocation10], %s352
        %s354 = sand.u32 %s84, 1
        %s355 = smul.addr %s354, 8
        %s356 = scalar_lea.vmem [#allocation9], %s355
        %p357 = pneg %p97
        %p358 = pneg %p94
        %p359 = pneg %p118
        %p360 = pneg %p115
        %p361 = pneg %p139
        %p362 = pneg %p136
        %p363 = pneg %p160
        %p364 = pneg %p157
        %p365 = pneg %p181
        %p366 = pneg %p178
        %p367 = pneg %p209
        %p368 = pneg %p206
        %s369 = sand.u32 %s196, 1
        %s370 = scalar_lea.sflag [#allocation8], %s369
        %s371 = sand.u32 %s196, 1
        %s372 = smul.addr %s371, 8
        %s373 = scalar_lea.vmem [#allocation15], %s372
        %p374 = scmp.eq.s32.totalorder %s34, 0
        // Predicated region
        $region65: #{tpu_custom_call.1} parent=43 // pred_check
          %p375 = pneg %p374
        $region66: #{tpu_custom_call.1} parent=43 // pred_check_branch
          %377 = sbr.rel (%p375) target = $region68
        $region67: #{tpu_custom_call.1} parent=43 // pred_region
          %v378 = vld [vmem:[%s328] sm:$0xff]
          %v379 = vld [vmem:[#allocation12] sm:$0xff]
          %v380 = vld [vmem:[#allocation12 + $0x8] sm:$0xff]
          %v381 = vld [vmem:[#allocation12 + $0x10] sm:$0xff]
          %v382 = vld [vmem:[#allocation12 + $0x18] sm:$0xff]
          %vm383 = vcmask 261120
          %v385 = vsel %vm383, %v378, 0
          %387 = vmatprep.subr.mxu0 0.0
          %388 = vmatpush1.msra.mxu0 0.0
          %389 = vmatprep.subr.mxu0 0.0
          %390 = vmatpush1.msra.mxu0 0.0
          %391 = vmatprep.subr.mxu0 0.0
          %392 = vmatpush1.msra.mxu0 0.0
          %393 = vmatprep.subr.mxu0 0.0
          %394 = vmatpush1.msra.mxu0 0.0
          %395 = vmatprep.subr.mxu0 0.0
          %396 = vmatpush1.msra.mxu0 0.0
          %397 = vmatprep.subr.mxu0 0.0
          %398 = vmatpush1.msra.mxu0 0.0
          %399 = vmatprep.subr.mxu0 0.0
          %400 = vmatpush1.msra.mxu0 0.0
          %401 = vmatprep.subr.mxu0 0.0
          %402 = vmatpush1.msra.mxu0 0.0
          %403 = vmatprep.subr.mxu0 0.0
          %404 = vmatpush1.msra.mxu0 0.0
          %405 = vmatprep.subr.mxu0 0.0
          %406 = vmatpush1.msra.mxu0 0.0
          %407 = vmatprep.subr.mxu0 0.0
          %408 = vmatpush1.msra.mxu0 0.0
          %409 = vmatprep.subr.mxu0 0.0
          %410 = vmatpush1.msra.mxu0 0.0
          %411 = vmatprep.subr.mxu0 0.0
          %412 = vmatpush1.msra.mxu0 %v382
          %413 = vmatprep.subr.mxu0 0.0
          %414 = vmatpush1.msra.mxu0 %v381
          %415 = vmatprep.subr.mxu0 0.0
          %416 = vmatpush1.msra.mxu0 %v380
          %417 = vmatprep.subr.mxu0 0.0
          %418 = vmatpush1.msra.mxu0 %v379
          %419 = vmatprep.subr.mxu0 0.0
          %420 = vmatpush2.msra.mxu0 0.0
          %421 = vmatprep.subr.mxu0 0.0
          %422 = vmatpush2.msra.mxu0 0.0
          %423 = vmatprep.subr.mxu0 0.0
          %424 = vmatpush2.msra.mxu0 0.0
          %425 = vmatprep.subr.mxu0 0.0
          %426 = vmatpush2.msra.mxu0 0.0
          %427 = vmatprep.subr.mxu0 0.0
          %428 = vmatpush2.msra.mxu0 0.0
          %429 = vmatprep.subr.mxu0 0.0
          %430 = vmatpush2.msra.mxu0 0.0
          %431 = vmatprep.subr.mxu0 0.0
          %432 = vmatpush2.msra.mxu0 0.0
          %433 = vmatprep.subr.mxu0 0.0
          %434 = vmatpush2.msra.mxu0 0.0
          %435 = vmatprep.subr.mxu0 0.0
          %436 = vmatpush2.msra.mxu0 0.0
          %437 = vmatprep.subr.mxu0 0.0
          %438 = vmatpush2.msra.mxu0 0.0
          %439 = vmatprep.subr.mxu0 0.0
          %440 = vmatpush2.msra.mxu0 0.0
          %441 = vmatprep.subr.mxu0 0.0
          %442 = vmatpush2.msra.mxu0 0.0
          %443 = vmatprep.subr.mxu0 0.0
          %444 = vmatpush2.msra.mxu0 0.0
          %445 = vmatprep.subr.mxu0 0.0
          %446 = vmatpush2.msra.mxu0 0.0
          %447 = vmatprep.subr.mxu0 0.0
          %448 = vmatpush2.msra.mxu0 0.0
          %449 = vmatprep.subr.mxu0 0.0
          %450 = vmatpush2.msra.mxu0 0.0
          %451 = vmatprep.mubr.f32.mxu0 0.0
          %452 = vmatmul.mubr.f32.gmra.mxu0 %v385
          %v453 = vpop.f32.mrf.mxu0
          %v454 = vadd.f32 0.0, %v453
          %v455 = vpop.f32.mrf.mxu0
          %456 = vdwg.mxu0
          %v457 = vxor.u32 %v454, 2147483648
          %v458 = vmul.f32 %v457, 1.442695
          %v459 = vpow.pop %v458
          %v460 = vadd.f32 %v459, 1.0
          %v461 = vrcp.pop %v460
          %v462 = vmul.f32 1.0, %v461
          %v463 = vmul.f32 %v462, 0.25
          %464 = vst.msk [vmem:[#allocation2] sm:$0xff] %vm383, %v463
          %vm465 = vcmask 7168
          %466 = vst.msk [vmem:[#allocation3] sm:$0xff] %vm465, -1e+30
          %467 = vst.msk [vmem:[#allocation3 + $0x8] sm:$0xff] %vm465, -1e+30
          %468 = vst.msk [vmem:[#allocation4] sm:$0xff] %vm465, 0.0
          %469 = vst.msk [vmem:[#allocation4 + $0x8] sm:$0xff] %vm465, 0.0
          %vm470 = vcmask 130048
          %471 = vst.msk [vmem:[#allocation5] sm:$0xff] %vm470, 0.0
          %472 = vst.msk [vmem:[#allocation5 + $0x8] sm:$0xff] %vm470, 0.0
        $region68: #{tpu_custom_call.1} parent=43 // pred_fallthru
          _
        %v473 = vld [vmem:[%s319] sm:$0xff]
        %v474 = vld [vmem:[#allocation11] sm:$0xff]
        %v475 = vld [vmem:[#allocation11 + $0x8] sm:$0xff]
        %v476 = vld [vmem:[#allocation11 + $0x10] sm:$0xff]
        %v477 = vld [vmem:[#allocation11 + $0x18] sm:$0xff]
        %vm478 = vcmask 261120
        %v480 = vsel %vm478, %v473, 0
        %482 = vmatprep.subr.mxu0 0.0
        %483 = vmatpush1.msra.mxu0 0.0
        %484 = vmatprep.subr.mxu0 0.0
        %485 = vmatpush1.msra.mxu0 0.0
        %486 = vmatprep.subr.mxu0 0.0
        %487 = vmatpush1.msra.mxu0 0.0
        %488 = vmatprep.subr.mxu0 0.0
        %489 = vmatpush1.msra.mxu0 0.0
        %490 = vmatprep.subr.mxu0 0.0
        %491 = vmatpush1.msra.mxu0 0.0
        %492 = vmatprep.subr.mxu0 0.0
        %493 = vmatpush1.msra.mxu0 0.0
        %494 = vmatprep.subr.mxu0 0.0
        %495 = vmatpush1.msra.mxu0 0.0
        %496 = vmatprep.subr.mxu0 0.0
        %497 = vmatpush1.msra.mxu0 0.0
        %498 = vmatprep.subr.mxu0 0.0
        %499 = vmatpush1.msra.mxu0 0.0
        %500 = vmatprep.subr.mxu0 0.0
        %501 = vmatpush1.msra.mxu0 0.0
        %502 = vmatprep.subr.mxu0 0.0
        %503 = vmatpush1.msra.mxu0 0.0
        %504 = vmatprep.subr.mxu0 0.0
        %505 = vmatpush1.msra.mxu0 0.0
        %506 = vmatprep.subr.mxu0 0.0
        %507 = vmatpush1.msra.mxu0 %v477
        %508 = vmatprep.subr.mxu0 0.0
        %509 = vmatpush1.msra.mxu0 %v476
        %510 = vmatprep.subr.mxu0 0.0
        %511 = vmatpush1.msra.mxu0 %v475
        %512 = vmatprep.subr.mxu0 0.0
        %513 = vmatpush1.msra.mxu0 %v474
        %514 = vmatprep.subr.mxu0 0.0
        %515 = vmatpush2.msra.mxu0 0.0
        %516 = vmatprep.subr.mxu0 0.0
        %517 = vmatpush2.msra.mxu0 0.0
        %518 = vmatprep.subr.mxu0 0.0
        %519 = vmatpush2.msra.mxu0 0.0
        %520 = vmatprep.subr.mxu0 0.0
        %521 = vmatpush2.msra.mxu0 0.0
        %522 = vmatprep.subr.mxu0 0.0
        %523 = vmatpush2.msra.mxu0 0.0
        %524 = vmatprep.subr.mxu0 0.0
        %525 = vmatpush2.msra.mxu0 0.0
        %526 = vmatprep.subr.mxu0 0.0
        %527 = vmatpush2.msra.mxu0 0.0
        %528 = vmatprep.subr.mxu0 0.0
        %529 = vmatpush2.msra.mxu0 0.0
        %530 = vmatprep.subr.mxu0 0.0
        %531 = vmatpush2.msra.mxu0 0.0
        %532 = vmatprep.subr.mxu0 0.0
        %533 = vmatpush2.msra.mxu0 0.0
        %534 = vmatprep.subr.mxu0 0.0
        %535 = vmatpush2.msra.mxu0 0.0
        %536 = vmatprep.subr.mxu0 0.0
        %537 = vmatpush2.msra.mxu0 0.0
        %538 = vmatprep.subr.mxu0 0.0
        %539 = vmatpush2.msra.mxu0 0.0
        %540 = vmatprep.subr.mxu0 0.0
        %541 = vmatpush2.msra.mxu0 0.0
        %542 = vmatprep.subr.mxu0 0.0
        %543 = vmatpush2.msra.mxu0 0.0
        %544 = vmatprep.subr.mxu0 0.0
        %545 = vmatpush2.msra.mxu0 0.0
        %546 = vmatprep.mubr.f32.mxu0 0.0
        %547 = vmatmul.mubr.f32.gmra.mxu0 %v480
        %v548 = vpop.f32.mrf.mxu0
        %v549 = vadd.f32 0.0, %v548
        %v550 = vpop.f32.mrf.mxu0
        %551 = vdwg.mxu0
        %v552 = vxor.u32 %v549, 2147483648
        %v553 = vmul.f32 %v552, 1.442695
        %v554 = vpow.pop %v553
        %v555 = vadd.f32 %v554, 1.0
        %v556 = vrcp.pop %v555
        %v557 = vmul.f32 1.0, %v556
        %v558 = vld [vmem:[#allocation2] sm:$0xff]
        %vm559 = vcmask 130048
        %v561 = vsel %vm559, %v558, 0
        %v564 = vsel %vm559, %v557, 0
        %566 = vmatprep.subr.mxu0 0.0
        %567 = vmatpush1.xpose.msra.mxu0 0.0
        %568 = vmatprep.subr.mxu0 0.0
        %569 = vmatpush1.xpose.msra.mxu0 0.0
        %570 = vmatprep.subr.mxu0 0.0
        %571 = vmatpush1.xpose.msra.mxu0 0.0
        %572 = vmatprep.subr.mxu0 0.0
        %573 = vmatpush1.xpose.msra.mxu0 0.0
        %574 = vmatprep.subr.mxu0 0.0
        %575 = vmatpush1.xpose.msra.mxu0 0.0
        %576 = vmatprep.subr.mxu0 0.0
        %577 = vmatpush1.xpose.msra.mxu0 0.0
        %578 = vmatprep.subr.mxu0 0.0
        %579 = vmatpush1.xpose.msra.mxu0 0.0
        %580 = vmatprep.subr.mxu0 0.0
        %581 = vmatpush1.xpose.msra.mxu0 0.0
        %582 = vmatprep.subr.mxu0 0.0
        %583 = vmatpush1.xpose.msra.mxu0 0.0
        %584 = vmatprep.subr.mxu0 0.0
        %585 = vmatpush1.xpose.msra.mxu0 0.0
        %586 = vmatprep.subr.mxu0 0.0
        %587 = vmatpush1.xpose.msra.mxu0 0.0
        %588 = vmatprep.subr.mxu0 0.0
        %589 = vmatpush1.xpose.msra.mxu0 0.0
        %590 = vmatprep.subr.mxu0 0.0
        %591 = vmatpush1.xpose.msra.mxu0 0.0
        %592 = vmatprep.subr.mxu0 0.0
        %593 = vmatpush1.xpose.msra.mxu0 0.0
        %594 = vmatprep.subr.mxu0 0.0
        %595 = vmatpush1.xpose.msra.mxu0 0.0
        %596 = vmatprep.subr.mxu0 0.0
        %597 = vmatpush1.xpose.msra.mxu0 %v564
        %598 = vmatprep.subr.mxu0 0.0
        %599 = vmatpush2.xpose.msra.mxu0 0.0
        %600 = vmatprep.subr.mxu0 0.0
        %601 = vmatpush2.xpose.msra.mxu0 0.0
        %602 = vmatprep.subr.mxu0 0.0
        %603 = vmatpush2.xpose.msra.mxu0 0.0
        %604 = vmatprep.subr.mxu0 0.0
        %605 = vmatpush2.xpose.msra.mxu0 0.0
        %606 = vmatprep.subr.mxu0 0.0
        %607 = vmatpush2.xpose.msra.mxu0 0.0
        %608 = vmatprep.subr.mxu0 0.0
        %609 = vmatpush2.xpose.msra.mxu0 0.0
        %610 = vmatprep.subr.mxu0 0.0
        %611 = vmatpush2.xpose.msra.mxu0 0.0
        %612 = vmatprep.subr.mxu0 0.0
        %613 = vmatpush2.xpose.msra.mxu0 0.0
        %614 = vmatprep.subr.mxu0 0.0
        %615 = vmatpush2.xpose.msra.mxu0 0.0
        %616 = vmatprep.subr.mxu0 0.0
        %617 = vmatpush2.xpose.msra.mxu0 0.0
        %618 = vmatprep.subr.mxu0 0.0
        %619 = vmatpush2.xpose.msra.mxu0 0.0
        %620 = vmatprep.subr.mxu0 0.0
        %621 = vmatpush2.xpose.msra.mxu0 0.0
        %622 = vmatprep.subr.mxu0 0.0
        %623 = vmatpush2.xpose.msra.mxu0 0.0
        %624 = vmatprep.subr.mxu0 0.0
        %625 = vmatpush2.xpose.msra.mxu0 0.0
        %626 = vmatprep.subr.mxu0 0.0
        %627 = vmatpush2.xpose.msra.mxu0 0.0
        %628 = vmatprep.subr.mxu0 0.0
        %629 = vmatpush2.xpose.msra.mxu0 0.0
        %630 = vmatprep.mubr.f32.mxu0 0.0
        %631 = vmatmul.mubr.f32.gmra.mxu0 %v561
        %v632 = vpop.f32.mrf.mxu0
        %v633 = vadd.f32 0.0, %v632
        %v634 = vpop.f32.mrf.mxu0
        %635 = vdwg.mxu0
        %v636 = vld [vmem:[#allocation3] sm:$0xff]
        %vm637 = vcmask 64512
        %v638 = vsel %vm637, %v633, -inf
        %639 = vmax.xlane.f32.xlu0 %v638
        %v640 = vpop.xlane.xlu0 %639
        %v641 = vmax.f32 %v636, %v640
        %v642 = vsub.f32 %v636, %v641
        %v643 = vmul.f32 %v642, 1.442695
        %v644 = vpow.pop %v643
        %646 = vset.pattern.permute.xlu0 0
        %647 = vperm.xlu0 %646, %v641
        %v648 = vpop.permute.xlu0 %647
        %v650 = vsub.f32 %v633, %v648
        %v651 = vmul.f32 %v650, 1.442695
        %v652 = vpow.pop %v651
        %v653 = vld [vmem:[#allocation4] sm:$0xff]
        %v654 = vmul.f32 %v644, %v653
        %v655 = vsel %vm637, %v652, 0.0
        %656 = vadd.xlane.f32.xlu0 %v655
        %v657 = vpop.xlane.xlu0 %656
        %v658 = vadd.f32 %v654, %v657
        %vm659 = vcmask 7168
        %660 = vst.msk [vmem:[#allocation4] sm:$0xff] %vm659, %v658
        %v661 = vld [vmem:[#allocation5] sm:$0xff]
        %663 = vset.pattern.permute.xlu0 0
        %664 = vperm.xlu0 %663, %v644
        %v665 = vpop.permute.xlu0 %664
        %v667 = vmul.f32 %v665, %v661
        %v669 = vsel %vm637, %v652, 0
        %671 = vmatprep.subr.mxu0 0.0
        %672 = vmatpush1.msra.mxu0 0.0
        %673 = vmatprep.subr.mxu0 0.0
        %674 = vmatpush1.msra.mxu0 0.0
        %675 = vmatprep.subr.mxu0 0.0
        %676 = vmatpush1.msra.mxu0 0.0
        %677 = vmatprep.subr.mxu0 0.0
        %678 = vmatpush1.msra.mxu0 0.0
        %679 = vmatprep.subr.mxu0 0.0
        %680 = vmatpush1.msra.mxu0 0.0
        %681 = vmatprep.subr.mxu0 0.0
        %682 = vmatpush1.msra.mxu0 0.0
        %683 = vmatprep.subr.mxu0 0.0
        %684 = vmatpush1.msra.mxu0 0.0
        %685 = vmatprep.subr.mxu0 0.0
        %686 = vmatpush1.msra.mxu0 0.0
        %687 = vmatprep.subr.mxu0 0.0
        %688 = vmatpush1.msra.mxu0 0.0
        %689 = vmatprep.subr.mxu0 0.0
        %690 = vmatpush1.msra.mxu0 0.0
        %691 = vmatprep.subr.mxu0 0.0
        %692 = vmatpush1.msra.mxu0 0.0
        %693 = vmatprep.subr.mxu0 0.0
        %694 = vmatpush1.msra.mxu0 0.0
        %695 = vmatprep.subr.mxu0 0.0
        %696 = vmatpush1.msra.mxu0 0.0
        %697 = vmatprep.subr.mxu0 0.0
        %698 = vmatpush1.msra.mxu0 0.0
        %699 = vmatprep.subr.mxu0 0.0
        %700 = vmatpush1.msra.mxu0 0.0
        %701 = vmatprep.subr.mxu0 0.0
        %702 = vmatpush1.msra.mxu0 %v557
        %703 = vmatprep.subr.mxu0 0.0
        %704 = vmatpush2.msra.mxu0 0.0
        %705 = vmatprep.subr.mxu0 0.0
        %706 = vmatpush2.msra.mxu0 0.0
        %707 = vmatprep.subr.mxu0 0.0
        %708 = vmatpush2.msra.mxu0 0.0
        %709 = vmatprep.subr.mxu0 0.0
        %710 = vmatpush2.msra.mxu0 0.0
        %711 = vmatprep.subr.mxu0 0.0
        %712 = vmatpush2.msra.mxu0 0.0
        %713 = vmatprep.subr.mxu0 0.0
        %714 = vmatpush2.msra.mxu0 0.0
        %715 = vmatprep.subr.mxu0 0.0
        %716 = vmatpush2.msra.mxu0 0.0
        %717 = vmatprep.subr.mxu0 0.0
        %718 = vmatpush2.msra.mxu0 0.0
        %719 = vmatprep.subr.mxu0 0.0
        %720 = vmatpush2.msra.mxu0 0.0
        %721 = vmatprep.subr.mxu0 0.0
        %722 = vmatpush2.msra.mxu0 0.0
        %723 = vmatprep.subr.mxu0 0.0
        %724 = vmatpush2.msra.mxu0 0.0
        %725 = vmatprep.subr.mxu0 0.0
        %726 = vmatpush2.msra.mxu0 0.0
        %727 = vmatprep.subr.mxu0 0.0
        %728 = vmatpush2.msra.mxu0 0.0
        %729 = vmatprep.subr.mxu0 0.0
        %730 = vmatpush2.msra.mxu0 0.0
        %731 = vmatprep.subr.mxu0 0.0
        %732 = vmatpush2.msra.mxu0 0.0
        %733 = vmatprep.subr.mxu0 0.0
        %734 = vmatpush2.msra.mxu0 0.0
        %735 = vmatprep.mubr.f32.mxu0 0.0
        %736 = vmatmul.mubr.f32.gmra.mxu0 %v669
        %v737 = vpop.f32.mrf.mxu0
        %v738 = vadd.f32 0.0, %v737
        %v739 = vpop.f32.mrf.mxu0
        %740 = vdwg.mxu0
        %v741 = vadd.f32 %v667, %v738
        %742 = vst.msk [vmem:[#allocation5] sm:$0xff] %vm559, %v741
        %743 = vst.msk [vmem:[#allocation3] sm:$0xff] %vm659, %v641
        %744 = vrot.lane.b32.xlu0 %v558, 112
        %v745 = vpop.permute.xlu0 %744
        %746 = vrot.lane.b32.xlu0 %v557, 112
        %v747 = vpop.permute.xlu0 %746
        %v748 = vsel %vm559, %v745, 0
        %v750 = vsel %vm559, %v747, 0
        %752 = vmatprep.subr.mxu0 0.0
        %753 = vmatpush1.xpose.msra.mxu0 0.0
        %754 = vmatprep.subr.mxu0 0.0
        %755 = vmatpush1.xpose.msra.mxu0 0.0
        %756 = vmatprep.subr.mxu0 0.0
        %757 = vmatpush1.xpose.msra.mxu0 0.0
        %758 = vmatprep.subr.mxu0 0.0
        %759 = vmatpush1.xpose.msra.mxu0 0.0
        %760 = vmatprep.subr.mxu0 0.0
        %761 = vmatpush1.xpose.msra.mxu0 0.0
        %762 = vmatprep.subr.mxu0 0.0
        %763 = vmatpush1.xpose.msra.mxu0 0.0
        %764 = vmatprep.subr.mxu0 0.0
        %765 = vmatpush1.xpose.msra.mxu0 0.0
        %766 = vmatprep.subr.mxu0 0.0
        %767 = vmatpush1.xpose.msra.mxu0 0.0
        %768 = vmatprep.subr.mxu0 0.0
        %769 = vmatpush1.xpose.msra.mxu0 0.0
        %770 = vmatprep.subr.mxu0 0.0
        %771 = vmatpush1.xpose.msra.mxu0 0.0
        %772 = vmatprep.subr.mxu0 0.0
        %773 = vmatpush1.xpose.msra.mxu0 0.0
        %774 = vmatprep.subr.mxu0 0.0
        %775 = vmatpush1.xpose.msra.mxu0 0.0
        %776 = vmatprep.subr.mxu0 0.0
        %777 = vmatpush1.xpose.msra.mxu0 0.0
        %778 = vmatprep.subr.mxu0 0.0
        %779 = vmatpush1.xpose.msra.mxu0 0.0
        %780 = vmatprep.subr.mxu0 0.0
        %781 = vmatpush1.xpose.msra.mxu0 0.0
        %782 = vmatprep.subr.mxu0 0.0
        %783 = vmatpush1.xpose.msra.mxu0 %v750
        %784 = vmatprep.subr.mxu0 0.0
        %785 = vmatpush2.xpose.msra.mxu0 0.0
        %786 = vmatprep.subr.mxu0 0.0
        %787 = vmatpush2.xpose.msra.mxu0 0.0
        %788 = vmatprep.subr.mxu0 0.0
        %789 = vmatpush2.xpose.msra.mxu0 0.0
        %790 = vmatprep.subr.mxu0 0.0
        %791 = vmatpush2.xpose.msra.mxu0 0.0
        %792 = vmatprep.subr.mxu0 0.0
        %793 = vmatpush2.xpose.msra.mxu0 0.0
        %794 = vmatprep.subr.mxu0 0.0
        %795 = vmatpush2.xpose.msra.mxu0 0.0
        %796 = vmatprep.subr.mxu0 0.0
        %797 = vmatpush2.xpose.msra.mxu0 0.0
        %798 = vmatprep.subr.mxu0 0.0
        %799 = vmatpush2.xpose.msra.mxu0 0.0
        %800 = vmatprep.subr.mxu0 0.0
        %801 = vmatpush2.xpose.msra.mxu0 0.0
        %802 = vmatprep.subr.mxu0 0.0
        %803 = vmatpush2.xpose.msra.mxu0 0.0
        %804 = vmatprep.subr.mxu0 0.0
        %805 = vmatpush2.xpose.msra.mxu0 0.0
        %806 = vmatprep.subr.mxu0 0.0
        %807 = vmatpush2.xpose.msra.mxu0 0.0
        %808 = vmatprep.subr.mxu0 0.0
        %809 = vmatpush2.xpose.msra.mxu0 0.0
        %810 = vmatprep.subr.mxu0 0.0
        %811 = vmatpush2.xpose.msra.mxu0 0.0
        %812 = vmatprep.subr.mxu0 0.0
        %813 = vmatpush2.xpose.msra.mxu0 0.0
        %814 = vmatprep.subr.mxu0 0.0
        %815 = vmatpush2.xpose.msra.mxu0 0.0
        %816 = vmatprep.mubr.f32.mxu0 0.0
        %817 = vmatmul.mubr.f32.gmra.mxu0 %v748
        %v818 = vpop.f32.mrf.mxu0
        %v819 = vadd.f32 0.0, %v818
        %v820 = vpop.f32.mrf.mxu0
        %821 = vdwg.mxu0
        %s822 = scalar_lea.vmem [#allocation3], 8
        %v823 = vld [vmem:[%s822] sm:$0xff]
        %v824 = vsel %vm637, %v819, -inf
        %825 = vmax.xlane.f32.xlu0 %v824
        %v826 = vpop.xlane.xlu0 %825
        %v827 = vmax.f32 %v823, %v826
        %v828 = vsub.f32 %v823, %v827
        %v829 = vmul.f32 %v828, 1.442695
        %v830 = vpow.pop %v829
        %832 = vset.pattern.permute.xlu0 0
        %833 = vperm.xlu0 %832, %v827
        %v834 = vpop.permute.xlu0 %833
        %v836 = vsub.f32 %v819, %v834
        %v837 = vmul.f32 %v836, 1.442695
        %v838 = vpow.pop %v837
        %s839 = scalar_lea.vmem [#allocation4], 8
        %v840 = vld [vmem:[%s839] sm:$0xff]
        %v841 = vmul.f32 %v830, %v840
        %v842 = vsel %vm637, %v838, 0.0
        %843 = vadd.xlane.f32.xlu0 %v842
        %v844 = vpop.xlane.xlu0 %843
        %v845 = vadd.f32 %v841, %v844
        %846 = vst.msk [vmem:[%s839] sm:$0xff] %vm659, %v845
        %s847 = scalar_lea.vmem [#allocation5], 8
        %v848 = vld [vmem:[%s847] sm:$0xff]
        %850 = vset.pattern.permute.xlu0 0
        %851 = vperm.xlu0 %850, %v830
        %v852 = vpop.permute.xlu0 %851
        %v854 = vmul.f32 %v852, %v848
        %v857 = vsel %vm637, %v838, 0
        %859 = vmatprep.subr.mxu0 0.0
        %860 = vmatpush1.msra.mxu0 0.0
        %861 = vmatprep.subr.mxu0 0.0
        %862 = vmatpush1.msra.mxu0 0.0
        %863 = vmatprep.subr.mxu0 0.0
        %864 = vmatpush1.msra.mxu0 0.0
        %865 = vmatprep.subr.mxu0 0.0
        %866 = vmatpush1.msra.mxu0 0.0
        %867 = vmatprep.subr.mxu0 0.0
        %868 = vmatpush1.msra.mxu0 0.0
        %869 = vmatprep.subr.mxu0 0.0
        %870 = vmatpush1.msra.mxu0 0.0
        %871 = vmatprep.subr.mxu0 0.0
        %872 = vmatpush1.msra.mxu0 0.0
        %873 = vmatprep.subr.mxu0 0.0
        %874 = vmatpush1.msra.mxu0 0.0
        %875 = vmatprep.subr.mxu0 0.0
        %876 = vmatpush1.msra.mxu0 0.0
        %877 = vmatprep.subr.mxu0 0.0
        %878 = vmatpush1.msra.mxu0 0.0
        %879 = vmatprep.subr.mxu0 0.0
        %880 = vmatpush1.msra.mxu0 0.0
        %881 = vmatprep.subr.mxu0 0.0
        %882 = vmatpush1.msra.mxu0 0.0
        %883 = vmatprep.subr.mxu0 0.0
        %884 = vmatpush1.msra.mxu0 0.0
        %885 = vmatprep.subr.mxu0 0.0
        %886 = vmatpush1.msra.mxu0 0.0
        %887 = vmatprep.subr.mxu0 0.0
        %888 = vmatpush1.msra.mxu0 0.0
        %889 = vmatprep.subr.mxu0 0.0
        %890 = vmatpush1.msra.mxu0 %v747
        %891 = vmatprep.subr.mxu0 0.0
        %892 = vmatpush2.msra.mxu0 0.0
        %893 = vmatprep.subr.mxu0 0.0
        %894 = vmatpush2.msra.mxu0 0.0
        %895 = vmatprep.subr.mxu0 0.0
        %896 = vmatpush2.msra.mxu0 0.0
        %897 = vmatprep.subr.mxu0 0.0
        %898 = vmatpush2.msra.mxu0 0.0
        %899 = vmatprep.subr.mxu0 0.0
        %900 = vmatpush2.msra.mxu0 0.0
        %901 = vmatprep.subr.mxu0 0.0
        %902 = vmatpush2.msra.mxu0 0.0
        %903 = vmatprep.subr.mxu0 0.0
        %904 = vmatpush2.msra.mxu0 0.0
        %905 = vmatprep.subr.mxu0 0.0
        %906 = vmatpush2.msra.mxu0 0.0
        %907 = vmatprep.subr.mxu0 0.0
        %908 = vmatpush2.msra.mxu0 0.0
        %909 = vmatprep.subr.mxu0 0.0
        %910 = vmatpush2.msra.mxu0 0.0
        %911 = vmatprep.subr.mxu0 0.0
        %912 = vmatpush2.msra.mxu0 0.0
        %913 = vmatprep.subr.mxu0 0.0
        %914 = vmatpush2.msra.mxu0 0.0
        %915 = vmatprep.subr.mxu0 0.0
        %916 = vmatpush2.msra.mxu0 0.0
        %917 = vmatprep.subr.mxu0 0.0
        %918 = vmatpush2.msra.mxu0 0.0
        %919 = vmatprep.subr.mxu0 0.0
        %920 = vmatpush2.msra.mxu0 0.0
        %921 = vmatprep.subr.mxu0 0.0
        %922 = vmatpush2.msra.mxu0 0.0
        %923 = vmatprep.mubr.f32.mxu0 0.0
        %924 = vmatmul.mubr.f32.gmra.mxu0 %v857
        %v925 = vpop.f32.mrf.mxu0
        %v926 = vadd.f32 0.0, %v925
        %v927 = vpop.f32.mrf.mxu0
        %928 = vdwg.mxu0
        %v929 = vadd.f32 %v854, %v926
        %930 = vst.msk [vmem:[%s847] sm:$0xff] %vm559, %v929
        %931 = vst.msk [vmem:[%s822] sm:$0xff] %vm659, %v827
        // Predicated region
        $region69: #{tpu_custom_call.1} parent=43 // pred_check
          %p932 = pneg %p374
        $region70: #{tpu_custom_call.1} parent=43 // pred_check_branch
          %934 = sbr.rel (%p932) target = $region72
        $region71: #{tpu_custom_call.1} parent=43 // pred_region
          %v935 = vld [vmem:[#allocation14] sm:$0xff]
          %v936 = vld [vmem:[#allocation14 + $0x8] sm:$0xff]
          %v937 = vld [vmem:[#allocation14 + $0x10] sm:$0xff]
          %v938 = vld [vmem:[#allocation14 + $0x18] sm:$0xff]
          %v939 = vld [vmem:[#allocation5] sm:$0xff]
          %v940 = vld [vmem:[#allocation4] sm:$0xff]
          %942 = vset.pattern.permute.xlu0 0
          %943 = vperm.xlu0 %942, %v940
          %v944 = vpop.permute.xlu0 %943
          %v946 = vrcp.pop %v944
          %v947 = vmul.f32 %v939, %v946
          %v948 = vld [vmem:[%s847] sm:$0xff]
          %v949 = vld [vmem:[%s839] sm:$0xff]
          %951 = vset.pattern.permute.xlu0 0
          %952 = vperm.xlu0 %951, %v949
          %v953 = vpop.permute.xlu0 %952
          %v955 = vrcp.pop %v953
          %v956 = vmul.f32 %v948, %v955
          %v958 = vsel %vm559, %v956, 0
          %960 = vmatprep.subr.mxu0 0.0
          %961 = vmatpush1.msra.mxu0 0.0
          %962 = vmatprep.subr.mxu0 0.0
          %963 = vmatpush1.msra.mxu0 0.0
          %964 = vmatprep.subr.mxu0 0.0
          %965 = vmatpush1.msra.mxu0 0.0
          %966 = vmatprep.subr.mxu0 0.0
          %967 = vmatpush1.msra.mxu0 0.0
          %968 = vmatprep.subr.mxu0 0.0
          %969 = vmatpush1.msra.mxu0 0.0
          %970 = vmatprep.subr.mxu0 0.0
          %971 = vmatpush1.msra.mxu0 0.0
          %972 = vmatprep.subr.mxu0 0.0
          %973 = vmatpush1.msra.mxu0 0.0
          %974 = vmatprep.subr.mxu0 0.0
          %975 = vmatpush1.msra.mxu0 0.0
          %976 = vmatprep.subr.mxu0 0.0
          %977 = vmatpush1.msra.mxu0 0.0
          %978 = vmatprep.subr.mxu0 0.0
          %979 = vmatpush1.msra.mxu0 0.0
          %980 = vmatprep.subr.mxu0 0.0
          %981 = vmatpush1.msra.mxu0 0.0
          %982 = vmatprep.subr.mxu0 0.0
          %983 = vmatpush1.msra.mxu0 0.0
          %984 = vmatprep.subr.mxu0 0.0
          %985 = vmatpush1.msra.mxu0 0.0
          %986 = vmatprep.subr.mxu0 0.0
          %987 = vmatpush1.msra.mxu0 0.0
          %988 = vmatprep.subr.mxu0 0.0
          %989 = vmatpush1.msra.mxu0 %v938
          %990 = vmatprep.subr.mxu0 0.0
          %991 = vmatpush1.msra.mxu0 %v937
          %992 = vmatprep.subr.mxu0 0.0
          %993 = vmatpush2.msra.mxu0 0.0
          %994 = vmatprep.subr.mxu0 0.0
          %995 = vmatpush2.msra.mxu0 0.0
          %996 = vmatprep.subr.mxu0 0.0
          %997 = vmatpush2.msra.mxu0 0.0
          %998 = vmatprep.subr.mxu0 0.0
          %999 = vmatpush2.msra.mxu0 0.0
          %1000 = vmatprep.subr.mxu0 0.0
          %1001 = vmatpush2.msra.mxu0 0.0
          %1002 = vmatprep.subr.mxu0 0.0
          %1003 = vmatpush2.msra.mxu0 0.0
          %1004 = vmatprep.subr.mxu0 0.0
          %1005 = vmatpush2.msra.mxu0 0.0
          %1006 = vmatprep.subr.mxu0 0.0
          %1007 = vmatpush2.msra.mxu0 0.0
          %1008 = vmatprep.subr.mxu0 0.0
          %1009 = vmatpush2.msra.mxu0 0.0
          %1010 = vmatprep.subr.mxu0 0.0
          %1011 = vmatpush2.msra.mxu0 0.0
          %1012 = vmatprep.subr.mxu0 0.0
          %1013 = vmatpush2.msra.mxu0 0.0
          %1014 = vmatprep.subr.mxu0 0.0
          %1015 = vmatpush2.msra.mxu0 0.0
          %1016 = vmatprep.subr.mxu0 0.0
          %1017 = vmatpush2.msra.mxu0 0.0
          %1018 = vmatprep.subr.mxu0 0.0
          %1019 = vmatpush2.msra.mxu0 0.0
          %1020 = vmatprep.subr.mxu0 0.0
          %1021 = vmatpush2.msra.mxu0 0.0
          %1022 = vmatprep.subr.mxu0 0.0
          %1023 = vmatpush2.msra.mxu0 0.0
          %1024 = vmatprep.mubr.f32.mxu0 0.0
          %1025 = vmatmul.mubr.f32.gmra.mxu0 %v958
          %v1026 = vpop.f32.mrf.mxu0
          %v1027 = vadd.f32 0.0, %v1026
          %v1028 = vpop.f32.mrf.mxu0
          %1029 = vdwg.mxu0
          %v1031 = vsel %vm559, %v947, 0
          %1033 = vmatprep.subr.mxu0 0.0
          %1034 = vmatpush1.msra.mxu0 0.0
          %1035 = vmatprep.subr.mxu0 0.0
          %1036 = vmatpush1.msra.mxu0 0.0
          %1037 = vmatprep.subr.mxu0 0.0
          %1038 = vmatpush1.msra.mxu0 0.0
          %1039 = vmatprep.subr.mxu0 0.0
          %1040 = vmatpush1.msra.mxu0 0.0
          %1041 = vmatprep.subr.mxu0 0.0
          %1042 = vmatpush1.msra.mxu0 0.0
          %1043 = vmatprep.subr.mxu0 0.0
          %1044 = vmatpush1.msra.mxu0 0.0
          %1045 = vmatprep.subr.mxu0 0.0
          %1046 = vmatpush1.msra.mxu0 0.0
          %1047 = vmatprep.subr.mxu0 0.0
          %1048 = vmatpush1.msra.mxu0 0.0
          %1049 = vmatprep.subr.mxu0 0.0
          %1050 = vmatpush1.msra.mxu0 0.0
          %1051 = vmatprep.subr.mxu0 0.0
          %1052 = vmatpush1.msra.mxu0 0.0
          %1053 = vmatprep.subr.mxu0 0.0
          %1054 = vmatpush1.msra.mxu0 0.0
          %1055 = vmatprep.subr.mxu0 0.0
          %1056 = vmatpush1.msra.mxu0 0.0
          %1057 = vmatprep.subr.mxu0 0.0
          %1058 = vmatpush1.msra.mxu0 0.0
          %1059 = vmatprep.subr.mxu0 0.0
          %1060 = vmatpush1.msra.mxu0 0.0
          %1061 = vmatprep.subr.mxu0 0.0
          %1062 = vmatpush1.msra.mxu0 %v936
          %1063 = vmatprep.subr.mxu0 0.0
          %1064 = vmatpush1.msra.mxu0 %v935
          %1065 = vmatprep.subr.mxu0 0.0
          %1066 = vmatpush2.msra.mxu0 0.0
          %1067 = vmatprep.subr.mxu0 0.0
          %1068 = vmatpush2.msra.mxu0 0.0
          %1069 = vmatprep.subr.mxu0 0.0
          %1070 = vmatpush2.msra.mxu0 0.0
          %1071 = vmatprep.subr.mxu0 0.0
          %1072 = vmatpush2.msra.mxu0 0.0
          %1073 = vmatprep.subr.mxu0 0.0
          %1074 = vmatpush2.msra.mxu0 0.0
          %1075 = vmatprep.subr.mxu0 0.0
          %1076 = vmatpush2.msra.mxu0 0.0
          %1077 = vmatprep.subr.mxu0 0.0
          %1078 = vmatpush2.msra.mxu0 0.0
          %1079 = vmatprep.subr.mxu0 0.0
          %1080 = vmatpush2.msra.mxu0 0.0
          %1081 = vmatprep.subr.mxu0 0.0
          %1082 = vmatpush2.msra.mxu0 0.0
          %1083 = vmatprep.subr.mxu0 0.0
          %1084 = vmatpush2.msra.mxu0 0.0
          %1085 = vmatprep.subr.mxu0 0.0
          %1086 = vmatpush2.msra.mxu0 0.0
          %1087 = vmatprep.subr.mxu0 0.0
          %1088 = vmatpush2.msra.mxu0 0.0
          %1089 = vmatprep.subr.mxu0 0.0
          %1090 = vmatpush2.msra.mxu0 0.0
          %1091 = vmatprep.subr.mxu0 0.0
          %1092 = vmatpush2.msra.mxu0 0.0
          %1093 = vmatprep.subr.mxu0 0.0
          %1094 = vmatpush2.msra.mxu0 0.0
          %1095 = vmatprep.subr.mxu0 0.0
          %1096 = vmatpush2.msra.mxu0 0.0
          %1097 = vmatprep.mubr.f32.mxu0 0.0
          %1098 = vmatmul.mubr.f32.gmra.mxu0 %v1031
          %v1099 = vpop.f32.mrf.mxu0
          %v1100 = vadd.f32 %v1027, %v1099
          %v1101 = vpop.f32.mrf.mxu0
          %1102 = vdwg.mxu0
          %v1103 = vld [vmem:[%s5] sm:$0x1]
          %v1105 = vlaneseq
          %v1106 = vshrl.u32 %v1105, 7
          %v1107 = vsub.s32 0, %v1106
          %v1108 = vrot.slane %v1103, %v1107
          %v1110 = vadd.f32 %v1100, %v1108
          %1111 = vst [vmem:[%s373] sm:$0xff] %v1110
        $region72: #{tpu_custom_call.1} parent=43 // pred_fallthru
          _
        %s1112 = sand.u32 %s196, 1
        %s1113 = scalar_lea.sflag [#allocation8], %s1112
        %s1114 = sand.u32 %s196, 1
        %s1115 = smul.addr %s1114, 8
        %s1116 = scalar_lea.vmem [#allocation15], %s1115
        // Predicated region
        $region73: #{tpu_custom_call.1} parent=43 // pred_check
          %p1117 = pneg %p206
        $region74: #{tpu_custom_call.1} parent=43 // pred_check_branch
          %1119 = sbr.rel (%p1117) target = $region76
        $region75: #{tpu_custom_call.1} parent=43 // pred_region
          %s1121 = ssub.s32 128, 128
          %1122 = vsyncadd %s1113, %s1121
          %s1123 = sadd.s32 %s33, %s32
          %s1124 = smul.addr %s1123, 128
          %s1125 = scalar_lea.hbm %s6, %s1124
          %s1127 = sshll.u32 %s1116, 4
          %s1128 = int_to_ptr.vmem [resolvable:$true] %s1127
          %1130 = dma.vmem_to_hbm [thread:$0]  %s1128, 128, %s1125, %s1113
        $region76: #{tpu_custom_call.1} parent=43 // pred_fallthru
          _
      $region44: #{tpu_custom_call.1} parent=5 // pred_fallthru
        _
      %p1131 = scmp.le.s32.totalorder 2, %s22
      // Predicated region
      $region77: #{tpu_custom_call.1} parent=5 // pred_check
        %p1132 = pneg %p1131
      $region78: #{tpu_custom_call.1} parent=5 // pred_check_branch
        %1134 = sbr.rel (%p1132) target = $region80
      $region79: #{tpu_custom_call.1} parent=5 // pred_region
        %s1135 = ssub.s32 %s22, 2
        // Predicated region
        $region81: #{tpu_custom_call.1} parent=79 // pred_check
          %p1136 = pneg %p212
        $region82: #{tpu_custom_call.1} parent=79 // pred_check_branch
          %1138 = sbr.rel (%p1136) target = $region84
        $region83: #{tpu_custom_call.1} parent=79 // pred_region
          %s1139 = sand.u32 %s197, 1
          %s1140 = scalar_lea.sflag [#allocation8], %s1139
          %s1141 = sand.u32 %s197, 1
          %s1142 = smul.addr %s1141, 8
          %s1143 = scalar_lea.vmem [#allocation15], %s1142
          %1144 = dma.done %s1140, 128
        $region84: #{tpu_custom_call.1} parent=79 // pred_fallthru
          _
      $region80: #{tpu_custom_call.1} parent=5 // pred_fallthru
        _
    $region6: #{tpu_custom_call.1} parent=1 // loop_footer
      %s26 = sadd.s32 1, %s22
    $region7: #{tpu_custom_call.1} parent=1 // loop_footer_branch
      %21 = sbr.rel target = $region3
    $region8: #{tpu_custom_call.1} parent=1 // loop_exit
      _
    %1145 = vsyncpa [#allocation7], 1
    %s1146 = scalar_lea.sflag [#allocation7], 1
    %1147 = vsyncpa %s1146, 1
    %1148 = vsyncpa [#allocation10], 1
    %s1149 = scalar_lea.sflag [#allocation10], 1
    %1150 = vsyncpa %s1149, 1
    %1151 = vsyncpa [#allocation13], 1
    %1152 = vsyncpa [#allocation8], 1
    %s1153 = scalar_lea.sflag [#allocation8], 1
    %1154 = vsyncpa %s1153, 1

</llo_original>
